<compile_context>
chip_gen: v7x
topology: tpu7x:2x2x1
jax: 0.10.0
libtpu: 0.0.40
codegen_flags: <defaults>
</compile_context>

<pallas_src>
import numpy as np
import jax
import jax.numpy as jnp
from jax.experimental import pallas as pl
from jax.experimental.pallas import tpu as pltpu

# ---------------- synthetic config (mirrors cfg.* of YOLOScript) ----------------
NUM_CLASSES  = 20
BBOX_ATTRS   = 5 + NUM_CLASSES                     # 25
ANCHORS      = np.array([[4., 5.], [8., 9.], [12., 16.],
                         [20., 22.], [30., 36.], [50., 48.]], dtype=np.float32)
ANCHORS_MASK = [[3, 4, 5], [1, 2, 3]]              # coarse head, fine head
INPUT_SHAPE  = (32, 32)                            # (H, W) network input (small test size)
HEAD_STRIDES = (8, 4)                              # -> feature maps 4x4 and 8x8
HIDDEN       = 32
IN_CHANNELS  = 3

NUM_ANCHORS   = len(ANCHORS_MASK[0])               # 3
HEAD_W        = NUM_ANCHORS * BBOX_ATTRS           # 75 raw channels per head
K_PAD         = 8                                  # in-channels padded to f32 sublane quantum
LANES         = 128                                # lane-dense packed width (both heads share)
COARSE_HW     = INPUT_SHAPE[0] // HEAD_STRIDES[0]  # 4
FINE_HW       = INPUT_SHAPE[0] // HEAD_STRIDES[1]  # 8
COARSE_CELLS  = COARSE_HW * COARSE_HW              # 16
FINE_CELLS    = FINE_HW * FINE_HW                  # 64
ROWS_PER_IMG  = COARSE_CELLS + FINE_CELLS          # 80 grid-cell rows per image

assert HEAD_W <= LANES
assert ROWS_PER_IMG % 8 == 0                       # sublane-aligned per-image block


def _pick_imgs_per_block(batch, target_rows=1280):
    """Images per grid step.  target_rows=1280 (=5*256) fills the v6e/v7x MXU and amortizes the
    ~0.35us per-step cost; on v5e any multiple of 128 rows is already fine.  Must divide batch."""
    ipb = max(1, min(batch, target_rows // ROWS_PER_IMG))
    while batch % ipb:
        ipb -= 1
    return ipb


# ---------------- the single fused Pallas kernel ----------------
def _fused_head_decode_kernel(x_ref, w1_ref, b1_ref, w2c_ref, b2c_ref, w2f_ref, b2f_ref,
                              add_ref, mul_ref, o_ref):
    # x_ref:       [ipb*80, 8]   pooled rows (ipb images)     w1: [8, 32]    b1: [1, 32]
    # w2c/w2f:     [32, 128]     per-head second-layer weights (lanes [0,75) used)
    # b2c/b2f:     [1, 128]
    # add/mul:     [ipb*80, 128] decode offsets / scales (constant block -> resident in VMEM)
    # o_ref:       [ipb*80, 128] decoded, lane-dense output
    nrows = x_ref.shape[0]

    h = jnp.dot(x_ref[...], w1_ref[...], preferred_element_type=jnp.float32)
    h = jnp.maximum(h + b1_ref[...], 0.0)                                   # linear1 + ReLU

    # Both head matmuls on the full row block; per-row select keeps the output 128 lanes wide.
    # (Extra MXU work is negligible -- the kernel is HBM-bound.)
    pc = jnp.dot(h, w2c_ref[...], preferred_element_type=jnp.float32) + b2c_ref[...]
    pf = jnp.dot(h, w2f_ref[...], preferred_element_type=jnp.float32) + b2f_ref[...]
    row = jax.lax.broadcasted_iota(jnp.int32, (nrows, 1), 0)
    is_coarse = (row % ROWS_PER_IMG) < COARSE_CELLS                          # [rows, 1] mask
    p = jnp.where(is_coarse, pc, pf)

    # YOLO decode.  Lane mask built at (1, 128) and broadcast (no full-tile iota / mod).
    lane = jax.lax.broadcasted_iota(jnp.int32, (1, LANES), 1)
    attr = lane % BBOX_ATTRS
    is_wh = (attr == 2) | (attr == 3)                                        # exp lanes (tw, th)

    # One exp per lane: wh lanes need exp(p), the rest need sigmoid(p) = 1/(1+exp(-p)).
    # Clamp guards inf on out-of-distribution logits (documented semantic deviation).
    arg = jnp.minimum(jnp.where(is_wh, p, -p), 40.0)
    e = jnp.exp(arg)                                                         # single EUP exp
    sig = pl.reciprocal(1.0 + e, approx=True)                                # EUP vrcp
    decoded = jnp.where(is_wh, e, sig + add_ref[...])
    o_ref[...] = (decoded * mul_ref[...]).astype(o_ref.dtype)


def fused_head_decode(rows, w1, b1, w2c, b2c, w2f, b2f, add, mul, *, batch, imgs_per_block):
    """rows: [batch*80, 8] -> decoded, lane-packed [batch*80, 128]."""
    block_rows = imgs_per_block * ROWS_PER_IMG
    m = batch * ROWS_PER_IMG
    return pl.pallas_call(
        _fused_head_decode_kernel,
        out_shape=jax.ShapeDtypeStruct((m, LANES), jnp.float32),
        grid=(batch // imgs_per_block,),
        in_specs=[
            pl.BlockSpec((block_rows, K_PAD), lambda b: (b, 0)),   # pooled rows (per block)
            pl.BlockSpec((K_PAD, HIDDEN),     lambda b: (0, 0)),   # w1 (shared, resident)
            pl.BlockSpec((1, HIDDEN),         lambda b: (0, 0)),   # b1
            pl.BlockSpec((HIDDEN, LANES),     lambda b: (0, 0)),   # w2 coarse
            pl.BlockSpec((1, LANES),          lambda b: (0, 0)),   # b2 coarse
            pl.BlockSpec((HIDDEN, LANES),     lambda b: (0, 0)),   # w2 fine
            pl.BlockSpec((1, LANES),          lambda b: (0, 0)),   # b2 fine
            pl.BlockSpec((block_rows, LANES), lambda b: (0, 0)),   # decode add (constant block)
            pl.BlockSpec((block_rows, LANES), lambda b: (0, 0)),   # decode mul (constant block)
        ],
        out_specs=pl.BlockSpec((block_rows, LANES), lambda b: (b, 0)),
        compiler_params=pltpu.CompilerParams(
            dimension_semantics=("parallel",),          # v7x: shard blocks across 2 TCs
            vmem_limit_bytes=32 * 1024 * 1024),         # explicit (v7x scoped default = 32 MiB)
        # NOTE: at real YOLO resolution keep block_rows a multiple of 256 (v6e/v7x) / 128 (v5e)
        # and size x+add+mul+out (double-buffered) against the 32 MiB limit above.
    )(rows, w1, b1, w2c, b2c, w2f, b2f, add, mul)


# ---------------- host-side (numpy, trace-time) decode auxiliaries ----------------
def _head_aux_block(hf, wf, mask, input_shape):
    """Per-cell add/mul planes of shape [hf*wf, 3*BBOX_ATTRS] for one head."""
    stride_h = input_shape[0] / hf
    stride_w = input_shape[1] / wf
    scaled = ANCHORS[np.array(mask)] / np.array([stride_w, stride_h], dtype=np.float32)
    cells = hf * wf
    gy, gx = np.meshgrid(np.arange(hf, dtype=np.float32),
                         np.arange(wf, dtype=np.float32), indexing="ij")
    gx = gx.reshape(cells)
    gy = gy.reshape(cells)
    add = np.zeros((cells, NUM_ANCHORS, BBOX_ATTRS), np.float32)
    mul = np.ones((cells, NUM_ANCHORS, BBOX_ATTRS), np.float32)
    add[:, :, 0] = gx[:, None]                    # bx = (sigmoid(tx) + grid_x) / Wf
    add[:, :, 1] = gy[:, None]                    # by = (sigmoid(ty) + grid_y) / Hf
    mul[:, :, 0] = 1.0 / wf
    mul[:, :, 1] = 1.0 / hf
    mul[:, :, 2] = (scaled[:, 0] / wf)[None, :]   # bw = exp(tw) * aw / Wf
    mul[:, :, 3] = (scaled[:, 1] / hf)[None, :]   # bh = exp(th) * ah / Hf
    return (add.reshape(cells, HEAD_W), mul.reshape(cells, HEAD_W))


def build_decode_aux(imgs_per_block):
    """Single per-image [80, 128] add/mul plane, tiled to one grid-step block (constant across
    the grid -> DMA'd once, VMEM-resident).  Padding lanes stay 0 so garbage never escapes."""
    add = np.zeros((ROWS_PER_IMG, LANES), np.float32)
    mul = np.zeros((ROWS_PER_IMG, LANES), np.float32)
    a_c, m_c = _head_aux_block(COARSE_HW, COARSE_HW, ANCHORS_MASK[0], INPUT_SHAPE)
    a_f, m_f = _head_aux_block(FINE_HW, FINE_HW, ANCHORS_MASK[1], INPUT_SHAPE)
    add[:COARSE_CELLS, :HEAD_W] = a_c
    mul[:COARSE_CELLS, :HEAD_W] = m_c
    add[COARSE_CELLS:, :HEAD_W] = a_f
    mul[COARSE_CELLS:, :HEAD_W] = m_f
    add = np.tile(add, (imgs_per_block, 1))
    mul = np.tile(mul, (imgs_per_block, 1))
    return jnp.asarray(add), jnp.asarray(mul)


# ---------------- synthetic "net" params (stand-in for checkpointed yolov4-tiny) ----------------
# TODO(synk): full CSPDarknet53-tiny backbone + torch.load(cfg.pth_dst) replaced by a small
# deterministic synthetic head; decode/NMS semantics downstream are faithful.
def init_params(key):
    k1, k2, k3 = jax.random.split(key, 3)
    cout = NUM_ANCHORS * BBOX_ATTRS
    return {
        "w1": jax.random.normal(k1, (IN_CHANNELS, HIDDEN), jnp.float32) * 0.3,
        "b1": jnp.zeros((1, HIDDEN), jnp.float32),
        "w2_coarse": jax.random.normal(k2, (HIDDEN, cout), jnp.float32) * 0.1,
        "b2_coarse": jnp.zeros((1, cout), jnp.float32),
        "w2_fine": jax.random.normal(k3, (HIDDEN, cout), jnp.float32) * 0.1,
        "b2_fine": jnp.zeros((1, cout), jnp.float32),
    }


def pack_params(params, imgs_per_block):
    """Pad/pack raw params into the lane-dense layouts the fused kernel expects."""
    w1p = jnp.pad(params["w1"], ((0, K_PAD - IN_CHANNELS), (0, 0)))
    w2c = jnp.pad(params["w2_coarse"], ((0, 0), (0, LANES - HEAD_W)))
    w2f = jnp.pad(params["w2_fine"],   ((0, 0), (0, LANES - HEAD_W)))
    b2c = jnp.pad(params["b2_coarse"], ((0, 0), (0, LANES - HEAD_W)))
    b2f = jnp.pad(params["b2_fine"],   ((0, 0), (0, LANES - HEAD_W)))
    add, mul = build_decode_aux(imgs_per_block)
    return {"w1": w1p, "b1": params["b1"], "w2c": w2c, "b2c": b2c,
            "w2f": w2f, "b2f": b2f, "add": add, "mul": mul}


# ---------------- device forward ----------------
def _avg_pool_nhwc(x, k):
    b, h, w, c = x.shape
    return x.reshape(b, h // k, k, w // k, k, c).mean(axis=(2, 4))


@jax.jit
def yolo_forward_device(images, packed):
    """images NCHW -> decoded boxes [B, 240, 25] (normalized cx, cy, w, h, obj, classes)."""
    b = images.shape[0]
    imgs_per_block = packed["add"].shape[0] // ROWS_PER_IMG        # static at trace time
    x = jnp.transpose(images, (0, 2, 3, 1)).astype(jnp.float32)    # NCHW -> NHWC (small)
    coarse = _avg_pool_nhwc(x, HEAD_STRIDES[0]).reshape(b, COARSE_CELLS, IN_CHANNELS)
    fine = _avg_pool_nhwc(x, HEAD_STRIDES[1]).reshape(b, FINE_CELLS, IN_CHANNELS)
    rows = jnp.concatenate([coarse, fine], axis=1)                 # [B, 80, 3]
    rows = jnp.pad(rows, ((0, 0), (0, 0), (0, K_PAD - IN_CHANNELS)))
    rows = rows.reshape(b * ROWS_PER_IMG, K_PAD)

    out = fused_head_decode(rows, packed["w1"], packed["b1"],
                            packed["w2c"], packed["b2c"], packed["w2f"], packed["b2f"],
                            packed["add"], packed["mul"],
                            batch=b, imgs_per_block=imgs_per_block)   # [B*80, 128]
    out = out.reshape(b, ROWS_PER_IMG, LANES)

    # Both heads live in lanes [0, 75); row ranges split coarse vs fine (cheap slices).
    coarse_boxes = out[:, :COARSE_CELLS, :HEAD_W].reshape(b, COARSE_CELLS * NUM_ANCHORS,
                                                          BBOX_ATTRS)
    fine_boxes = out[:, COARSE_CELLS:, :HEAD_W].reshape(b, FINE_CELLS * NUM_ANCHORS, BBOX_ATTRS)
    # Per-image box order is (cell, anchor) rather than torch's (anchor, cell); NMS is
    # order-invariant so forward() results are unchanged.
    return jnp.concatenate([coarse_boxes, fine_boxes], axis=1)        # [B, 240, 25]


# ---------------- host-side NMS (DecodeBoxScript.non_max_suppression equivalent) ----------------
def _bbox_iou(box, boxes):
    ix1 = np.maximum(box[0], boxes[:, 0]); iy1 = np.maximum(box[1], boxes[:, 1])
    ix2 = np.minimum(box[2], boxes[:, 2]); iy2 = np.minimum(box[3], boxes[:, 3])
    inter = np.clip(ix2 - ix1, 0, None) * np.clip(iy2 - iy1, 0, None)
    a1 = (box[2] - box[0]) * (box[3] - box[1])
    a2 = (boxes[:, 2] - boxes[:, 0]) * (boxes[:, 3] - boxes[:, 1])
    return inter / np.maximum(a1 + a2 - inter, 1e-9)


def non_max_suppression(prediction, num_classes, input_shape, image_shape,
                        conf_thres=0.5, nms_thres=0.3):
    # TODO(synk): variable-length per-image detection lists (torchvision.ops.nms + letterbox
    # correction) have no clean Pallas equivalent; done as host numpy postprocessing glue.
    pred = np.array(prediction, dtype=np.float32)
    cxcywh = pred[..., :4].copy()
    pred[..., 0] = cxcywh[..., 0] - cxcywh[..., 2] / 2
    pred[..., 1] = cxcywh[..., 1] - cxcywh[..., 3] / 2
    pred[..., 2] = cxcywh[..., 0] + cxcywh[..., 2] / 2
    pred[..., 3] = cxcywh[..., 1] + cxcywh[..., 3] / 2

    ih, iw = image_shape
    output = [None] * pred.shape[0]
    for b in range(pred.shape[0]):
        image_pred = pred[b]
        class_conf = image_pred[:, 5:5 + num_classes].max(axis=1)
        class_id = image_pred[:, 5:5 + num_classes].argmax(axis=1).astype(np.float32)
        keep = image_pred[:, 4] * class_conf >= conf_thres
        if not np.any(keep):
            continue
        det = np.concatenate([image_pred[keep, :5],
                              class_conf[keep, None],
                              class_id[keep, None]], axis=1)
        kept = []
        for c in np.unique(det[:, 6]):
            dc = det[det[:, 6] == c]
            dc = dc[np.argsort(-(dc[:, 4] * dc[:, 5]))]
            while dc.shape[0] > 0:
                kept.append(dc[0])
                if dc.shape[0] == 1:
                    break
                ious = _bbox_iou(dc[0, :4], dc[1:, :4])
                dc = dc[1:][ious < nms_thres]
        out = np.stack(kept, axis=0)
        out[:, [0, 2]] *= iw
        out[:, [1, 3]] *= ih
        output[b] = out
    return output


def yolo_script_forward(images, packed):
    """Equivalent of YOLOScript.forward(images) -> per-image detection results."""
    image_shape = images.shape[2:]
    outputs = jax.block_until_ready(yolo_forward_device(images, packed))
    return non_max_suppression(np.asarray(outputs), NUM_CLASSES, INPUT_SHAPE,
                               image_shape, conf_thres=0.5, nms_thres=0.3)


if __name__ == "__main__":
    key = jax.random.PRNGKey(0)
    pkey, xkey = jax.random.split(key)
    params = init_params(pkey)
    batch = 2
    imgs_per_block = _pick_imgs_per_block(batch)
    packed = pack_params(params, imgs_per_block)
    images = jax.random.uniform(
        xkey, (batch, IN_CHANNELS, INPUT_SHAPE[0], INPUT_SHAPE[1]), jnp.float32)

    decoded = jax.block_until_ready(yolo_forward_device(images, packed))
    total_boxes = NUM_ANCHORS * (COARSE_CELLS + FINE_CELLS)      # 240
    assert decoded.shape == (batch, total_boxes, BBOX_ATTRS), decoded.shape
    assert bool(jnp.all(jnp.isfinite(decoded)))

    _results = yolo_script_forward(images, packed)   # list (possibly [None, None]) like PyTorch
    print("KERNEL_OK")
</pallas_src>

<mosaic_0001>
module attributes {stable_mosaic.version = 11 : i64} {
  func.func @_fused_head_decode_kernel(%arg0: i32, %arg1: memref<160x8xf32, #tpu.memory_space<vmem>>, %arg2: memref<8x32xf32, #tpu.memory_space<vmem>>, %arg3: memref<1x32xf32, #tpu.memory_space<vmem>>, %arg4: memref<32x128xf32, #tpu.memory_space<vmem>>, %arg5: memref<1x128xf32, #tpu.memory_space<vmem>>, %arg6: memref<32x128xf32, #tpu.memory_space<vmem>>, %arg7: memref<1x128xf32, #tpu.memory_space<vmem>>, %arg8: memref<160x128xf32, #tpu.memory_space<vmem>>, %arg9: memref<160x128xf32, #tpu.memory_space<vmem>>, %arg10: memref<160x128xf32, #tpu.memory_space<vmem>>) attributes {dimension_semantics = [#tpu.dimension_semantics<parallel>], iteration_bounds = array<i64: 1>, scalar_prefetch = 0 : i64, scratch_operands = 0 : i64, tpu.core_type = #tpu.core_type<tc>, window_params = [{transform_indices = @transform_0, window_bounds = array<i64: 160, 8>}, {pipeline_mode = #tpu.pipeline_mode<synchronous>, transform_indices = @transform_1, window_bounds = array<i64: 8, 32>}, {pipeline_mode = #tpu.pipeline_mode<synchronous>, transform_indices = @transform_2, window_bounds = array<i64: 1, 32>}, {pipeline_mode = #tpu.pipeline_mode<synchronous>, transform_indices = @transform_3, window_bounds = array<i64: 32, 128>}, {pipeline_mode = #tpu.pipeline_mode<synchronous>, transform_indices = @transform_4, window_bounds = array<i64: 1, 128>}, {pipeline_mode = #tpu.pipeline_mode<synchronous>, transform_indices = @transform_5, window_bounds = array<i64: 32, 128>}, {pipeline_mode = #tpu.pipeline_mode<synchronous>, transform_indices = @transform_6, window_bounds = array<i64: 1, 128>}, {pipeline_mode = #tpu.pipeline_mode<synchronous>, transform_indices = @transform_7, window_bounds = array<i64: 160, 128>}, {pipeline_mode = #tpu.pipeline_mode<synchronous>, transform_indices = @transform_8, window_bounds = array<i64: 160, 128>}, {transform_indices = @transform_9, window_bounds = array<i64: 160, 128>}]} {
    %c0 = arith.constant 0 : index
    %c0_0 = arith.constant 0 : index
    %0 = vector.load %arg1[%c0, %c0_0] : memref<160x8xf32, #tpu.memory_space<vmem>>, vector<160x8xf32>
    %c0_1 = arith.constant 0 : index
    %c0_2 = arith.constant 0 : index
    %1 = vector.load %arg2[%c0_1, %c0_2] : memref<8x32xf32, #tpu.memory_space<vmem>>, vector<8x32xf32>
    %cst = arith.constant dense<0.000000e+00> : vector<160x32xf32>
    %2 = tpu.matmul %0, %1, %cst {dimension_numbers = #tpu.dot_dimension_numbers<[1], [0], [0], [1], [0, 0, 1, 1], [], []>} : vector<160x8xf32>, vector<8x32xf32>, vector<160x32xf32> -> vector<160x32xf32>
    %c0_3 = arith.constant 0 : index
    %c0_4 = arith.constant 0 : index
    %3 = vector.load %arg3[%c0_3, %c0_4] : memref<1x32xf32, #tpu.memory_space<vmem>>, vector<1x32xf32>
    %4 = vector.broadcast %3 : vector<1x32xf32> to vector<160x32xf32>
    %5 = arith.addf %2, %4 : vector<160x32xf32>
    %cst_5 = arith.constant 0.000000e+00 : f32
    %6 = vector.broadcast %cst_5 : f32 to vector<160x32xf32>
    %7 = arith.maximumf %5, %6 : vector<160x32xf32>
    %c0_6 = arith.constant 0 : index
    %c0_7 = arith.constant 0 : index
    %8 = vector.load %arg4[%c0_6, %c0_7] : memref<32x128xf32, #tpu.memory_space<vmem>>, vector<32x128xf32>
    %cst_8 = arith.constant dense<0.000000e+00> : vector<160x128xf32>
    %9 = tpu.matmul %7, %8, %cst_8 {dimension_numbers = #tpu.dot_dimension_numbers<[1], [0], [0], [1], [0, 0, 1, 1], [], []>} : vector<160x32xf32>, vector<32x128xf32>, vector<160x128xf32> -> vector<160x128xf32>
    %c0_9 = arith.constant 0 : index
    %c0_10 = arith.constant 0 : index
    %10 = vector.load %arg5[%c0_9, %c0_10] : memref<1x128xf32, #tpu.memory_space<vmem>>, vector<1x128xf32>
    %11 = vector.broadcast %10 : vector<1x128xf32> to vector<160x128xf32>
    %12 = arith.addf %9, %11 : vector<160x128xf32>
    %c0_11 = arith.constant 0 : index
    %c0_12 = arith.constant 0 : index
    %13 = vector.load %arg6[%c0_11, %c0_12] : memref<32x128xf32, #tpu.memory_space<vmem>>, vector<32x128xf32>
    %cst_13 = arith.constant dense<0.000000e+00> : vector<160x128xf32>
    %14 = tpu.matmul %7, %13, %cst_13 {dimension_numbers = #tpu.dot_dimension_numbers<[1], [0], [0], [1], [0, 0, 1, 1], [], []>} : vector<160x32xf32>, vector<32x128xf32>, vector<160x128xf32> -> vector<160x128xf32>
    %c0_14 = arith.constant 0 : index
    %c0_15 = arith.constant 0 : index
    %15 = vector.load %arg7[%c0_14, %c0_15] : memref<1x128xf32, #tpu.memory_space<vmem>>, vector<1x128xf32>
    %16 = vector.broadcast %15 : vector<1x128xf32> to vector<160x128xf32>
    %17 = arith.addf %14, %16 : vector<160x128xf32>
    %18 = tpu.iota {dimensions = array<i32: 0>} : vector<160x1xi32>
    %c80_i32 = arith.constant 80 : i32
    %c0_i32 = arith.constant 0 : i32
    %19 = arith.cmpi eq, %c80_i32, %c0_i32 : i32
    %c1_i32 = arith.constant 1 : i32
    %20 = arith.select %19, %c1_i32, %c80_i32 : i32
    %21 = vector.broadcast %20 : i32 to vector<160x1xi32>
    %22 = arith.remsi %18, %21 : vector<160x1xi32>
    %c0_i32_16 = arith.constant 0 : i32
    %23 = vector.broadcast %c0_i32_16 : i32 to vector<160x1xi32>
    %24 = arith.cmpi ne, %22, %23 : vector<160x1xi32>
    %c0_i32_17 = arith.constant 0 : i32
    %25 = vector.broadcast %c0_i32_17 : i32 to vector<160x1xi32>
    %26 = arith.cmpi slt, %22, %25 : vector<160x1xi32>
    %c0_i32_18 = arith.constant 0 : i32
    %27 = arith.cmpi slt, %20, %c0_i32_18 : i32
    %28 = vector.broadcast %27 : i1 to vector<160x1xi1>
    %29 = vector.broadcast %28 : vector<160x1xi1> to vector<160x1xi1>
    %30 = arith.xori %26, %29 : vector<160x1xi1>
    %31 = arith.andi %30, %24 : vector<160x1xi1>
    %32 = vector.broadcast %20 : i32 to vector<160x1xi32>
    %33 = arith.addi %22, %32 : vector<160x1xi32>
    %34 = arith.select %31, %33, %22 : vector<160x1xi1>, vector<160x1xi32>
    %c16_i32 = arith.constant 16 : i32
    %35 = vector.broadcast %c16_i32 : i32 to vector<160x1xi32>
    %36 = arith.cmpi slt, %34, %35 : vector<160x1xi32>
    %37 = vector.shape_cast %36 : vector<160x1xi1> to vector<160x1xi1>
    %38 = vector.broadcast %37 : vector<160x1xi1> to vector<160x128xi1>
    %39 = arith.select %38, %12, %17 : vector<160x128xi1>, vector<160x128xf32>
    %40 = tpu.iota {dimensions = array<i32: 1>} : vector<1x128xi32>
    %c25_i32 = arith.constant 25 : i32
    %c0_i32_19 = arith.constant 0 : i32
    %41 = arith.cmpi eq, %c25_i32, %c0_i32_19 : i32
    %c1_i32_20 = arith.constant 1 : i32
    %42 = arith.select %41, %c1_i32_20, %c25_i32 : i32
    %43 = vector.broadcast %42 : i32 to vector<1x128xi32>
    %44 = arith.remsi %40, %43 : vector<1x128xi32>
    %c0_i32_21 = arith.constant 0 : i32
    %45 = vector.broadcast %c0_i32_21 : i32 to vector<1x128xi32>
    %46 = arith.cmpi ne, %44, %45 : vector<1x128xi32>
    %c0_i32_22 = arith.constant 0 : i32
    %47 = vector.broadcast %c0_i32_22 : i32 to vector<1x128xi32>
    %48 = arith.cmpi slt, %44, %47 : vector<1x128xi32>
    %c0_i32_23 = arith.constant 0 : i32
    %49 = arith.cmpi slt, %42, %c0_i32_23 : i32
    %50 = vector.broadcast %49 : i1 to vector<1x128xi1>
    %51 = vector.broadcast %50 : vector<1x128xi1> to vector<1x128xi1>
    %52 = arith.xori %48, %51 : vector<1x128xi1>
    %53 = arith.andi %52, %46 : vector<1x128xi1>
    %54 = vector.broadcast %42 : i32 to vector<1x128xi32>
    %55 = arith.addi %44, %54 : vector<1x128xi32>
    %56 = arith.select %53, %55, %44 : vector<1x128xi1>, vector<1x128xi32>
    %c2_i32 = arith.constant 2 : i32
    %57 = vector.broadcast %c2_i32 : i32 to vector<1x128xi32>
    %58 = arith.cmpi eq, %56, %57 : vector<1x128xi32>
    %c3_i32 = arith.constant 3 : i32
    %59 = vector.broadcast %c3_i32 : i32 to vector<1x128xi32>
    %60 = arith.cmpi eq, %56, %59 : vector<1x128xi32>
    %61 = arith.ori %58, %60 : vector<1x128xi1>
    %cst_24 = arith.constant 0.000000e+00 : f32
    %62 = vector.broadcast %cst_24 : f32 to vector<160x128xf32>
    %63 = arith.subf %62, %39 : vector<160x128xf32>
    %64 = vector.shape_cast %61 : vector<1x128xi1> to vector<1x128xi1>
    %65 = vector.broadcast %64 : vector<1x128xi1> to vector<160x128xi1>
    %66 = arith.select %65, %39, %63 : vector<160x128xi1>, vector<160x128xf32>
    %cst_25 = arith.constant 4.000000e+01 : f32
    %67 = vector.broadcast %cst_25 : f32 to vector<160x128xf32>
    %68 = arith.minimumf %66, %67 : vector<160x128xf32>
    %69 = math.exp %68 : vector<160x128xf32>
    %cst_26 = arith.constant 1.000000e+00 : f32
    %70 = vector.broadcast %cst_26 : f32 to vector<160x128xf32>
    %71 = arith.addf %70, %69 : vector<160x128xf32>
    %72 = tpu.reciprocal %71 {approx = true} : vector<160x128xf32> -> vector<160x128xf32>
    %c0_27 = arith.constant 0 : index
    %c0_28 = arith.constant 0 : index
    %73 = vector.load %arg8[%c0_27, %c0_28] : memref<160x128xf32, #tpu.memory_space<vmem>>, vector<160x128xf32>
    %74 = arith.addf %72, %73 : vector<160x128xf32>
    %75 = vector.shape_cast %61 : vector<1x128xi1> to vector<1x128xi1>
    %76 = vector.broadcast %75 : vector<1x128xi1> to vector<160x128xi1>
    %77 = arith.select %76, %69, %74 : vector<160x128xi1>, vector<160x128xf32>
    %c0_29 = arith.constant 0 : index
    %c0_30 = arith.constant 0 : index
    %78 = vector.load %arg9[%c0_29, %c0_30] : memref<160x128xf32, #tpu.memory_space<vmem>>, vector<160x128xf32>
    %79 = arith.mulf %77, %78 : vector<160x128xf32>
    %c0_31 = arith.constant 0 : index
    %c0_32 = arith.constant 0 : index
    %80 = vector.load %arg10[%c0_31, %c0_32] : memref<160x128xf32, #tpu.memory_space<vmem>>, vector<160x128xf32>
    tpu.vector_store %arg10[%c0_31, %c0_32], %79 {strides = array<i32>} : memref<160x128xf32, #tpu.memory_space<vmem>>, vector<160x128xf32>,
    return
  }
  func.func @transform_0(%arg0: i32) -> (i32, i32) {
    %c0_i32 = arith.constant 0 : i32
    %c0_i32_0 = arith.constant 0 : i32
    return %arg0, %c0_i32 : i32, i32
  }
  func.func @transform_1(%arg0: i32) -> (i32, i32) {
    %c0_i32 = arith.constant 0 : i32
    %c0_i32_0 = arith.constant 0 : i32
    %c0_i32_1 = arith.constant 0 : i32
    return %c0_i32, %c0_i32_0 : i32, i32
  }
  func.func @transform_2(%arg0: i32) -> (i32, i32) {
    %c0_i32 = arith.constant 0 : i32
    %c0_i32_0 = arith.constant 0 : i32
    %c0_i32_1 = arith.constant 0 : i32
    return %c0_i32, %c0_i32_0 : i32, i32
  }
  func.func @transform_3(%arg0: i32) -> (i32, i32) {
    %c0_i32 = arith.constant 0 : i32
    %c0_i32_0 = arith.constant 0 : i32
    %c0_i32_1 = arith.constant 0 : i32
    return %c0_i32, %c0_i32_0 : i32, i32
  }
  func.func @transform_4(%arg0: i32) -> (i32, i32) {
    %c0_i32 = arith.constant 0 : i32
    %c0_i32_0 = arith.constant 0 : i32
    %c0_i32_1 = arith.constant 0 : i32
    return %c0_i32, %c0_i32_0 : i32, i32
  }
  func.func @transform_5(%arg0: i32) -> (i32, i32) {
    %c0_i32 = arith.constant 0 : i32
    %c0_i32_0 = arith.constant 0 : i32
    %c0_i32_1 = arith.constant 0 : i32
    return %c0_i32, %c0_i32_0 : i32, i32
  }
  func.func @transform_6(%arg0: i32) -> (i32, i32) {
    %c0_i32 = arith.constant 0 : i32
    %c0_i32_0 = arith.constant 0 : i32
    %c0_i32_1 = arith.constant 0 : i32
    return %c0_i32, %c0_i32_0 : i32, i32
  }
  func.func @transform_7(%arg0: i32) -> (i32, i32) {
    %c0_i32 = arith.constant 0 : i32
    %c0_i32_0 = arith.constant 0 : i32
    %c0_i32_1 = arith.constant 0 : i32
    return %c0_i32, %c0_i32_0 : i32, i32
  }
  func.func @transform_8(%arg0: i32) -> (i32, i32) {
    %c0_i32 = arith.constant 0 : i32
    %c0_i32_0 = arith.constant 0 : i32
    %c0_i32_1 = arith.constant 0 : i32
    return %c0_i32, %c0_i32_0 : i32, i32
  }
  func.func @transform_9(%arg0: i32) -> (i32, i32) {
    %c0_i32 = arith.constant 0 : i32
    %c0_i32_0 = arith.constant 0 : i32
    return %arg0, %c0_i32 : i32, i32
  }
}

</mosaic_0001>

<llo_original>
// kernel: yolo_forward_device.1
$region0: #{yolo_forward_device.1}
  #allocation0 [shape = 'u32[]', space=smem, size = 0x4, offset = 0x4, fixed_abs, tag = 'smem constant byte address 0x4 - core index']
  #allocation1 [shape = 'u32[144,128]{1,0:T(1,128)}', space=vmem, size = 0x12000, scoped, tag = 'internal scratch']
  %s0 = inlined_call_operand.vmem [shape: f32[160,8], index: 0, kind: input, shape index: {}]
  %s1 = inlined_call_operand.vmem [shape: f32[8,32], index: 1, kind: input, shape index: {}]
  %s2 = inlined_call_operand.vmem [shape: f32[1,32], index: 2, kind: input, shape index: {}]
  %s3 = inlined_call_operand.vmem [shape: f32[32,128], index: 3, kind: input, shape index: {}]
  %s4 = inlined_call_operand.vmem [shape: f32[1,128], index: 4, kind: input, shape index: {}]
  %s5 = inlined_call_operand.vmem [shape: f32[32,128], index: 5, kind: input, shape index: {}]
  %s6 = inlined_call_operand.vmem [shape: f32[1,128], index: 6, kind: input, shape index: {}]
  %s7 = inlined_call_operand.vmem [shape: f32[160,128], index: 7, kind: input, shape index: {}]
  %s8 = inlined_call_operand.vmem [shape: f32[160,128], index: 8, kind: input, shape index: {}]
  %s9 = inlined_call_operand.vmem [shape: f32[160,128], index: 9, kind: output, shape index: {}]
  %s10 = sld [smem:[#allocation0]]
  $region46: #{yolo_forward_device.1} parent=0
    _
  %s12 = ssub.s32 1, %s10
  %s13 = scalar_select 0, %s12, %s10
  // Predicated region
  $region2: #{yolo_forward_device.1} parent=0 // pred_check
    _
  $region3: #{yolo_forward_device.1} parent=0 // pred_check_branch
    %15 = sbr.rel (0) target = $region5
  $region4: #{yolo_forward_device.1} parent=0 // pred_region
    _
  $region5: #{yolo_forward_device.1} parent=0 // pred_fallthru
    _
  // Predicated region
  $region6: #{yolo_forward_device.1} parent=0 // pred_check
    _
  $region7: #{yolo_forward_device.1} parent=0 // pred_check_branch
    %17 = sbr.rel (0) target = $region9
  $region8: #{yolo_forward_device.1} parent=0 // pred_region
    _
  $region9: #{yolo_forward_device.1} parent=0 // pred_fallthru
    _
  // Predicated region
  $region10: #{yolo_forward_device.1} parent=0 // pred_check
    _
  $region11: #{yolo_forward_device.1} parent=0 // pred_check_branch
    %19 = sbr.rel (0) target = $region13
  $region12: #{yolo_forward_device.1} parent=0 // pred_region
    _
  $region13: #{yolo_forward_device.1} parent=0 // pred_fallthru
    _
  // Predicated region
  $region14: #{yolo_forward_device.1} parent=0 // pred_check
    _
  $region15: #{yolo_forward_device.1} parent=0 // pred_check_branch
    %21 = sbr.rel (0) target = $region17
  $region16: #{yolo_forward_device.1} parent=0 // pred_region
    _
  $region17: #{yolo_forward_device.1} parent=0 // pred_fallthru
    _
  // Predicated region
  $region18: #{yolo_forward_device.1} parent=0 // pred_check
    _
  $region19: #{yolo_forward_device.1} parent=0 // pred_check_branch
    %23 = sbr.rel (0) target = $region21
  $region20: #{yolo_forward_device.1} parent=0 // pred_region
    _
  $region21: #{yolo_forward_device.1} parent=0 // pred_fallthru
    _
  // Predicated region
  $region22: #{yolo_forward_device.1} parent=0 // pred_check
    _
  $region23: #{yolo_forward_device.1} parent=0 // pred_check_branch
    %25 = sbr.rel (0) target = $region25
  $region24: #{yolo_forward_device.1} parent=0 // pred_region
    _
  $region25: #{yolo_forward_device.1} parent=0 // pred_fallthru
    _
  // Predicated region
  $region26: #{yolo_forward_device.1} parent=0 // pred_check
    _
  $region27: #{yolo_forward_device.1} parent=0 // pred_check_branch
    %27 = sbr.rel (0) target = $region29
  $region28: #{yolo_forward_device.1} parent=0 // pred_region
    _
  $region29: #{yolo_forward_device.1} parent=0 // pred_fallthru
    _
  // Predicated region
  $region30: #{yolo_forward_device.1} parent=0 // pred_check
    _
  $region31: #{yolo_forward_device.1} parent=0 // pred_check_branch
    %29 = sbr.rel (0) target = $region33
  $region32: #{yolo_forward_device.1} parent=0 // pred_region
    _
  $region33: #{yolo_forward_device.1} parent=0 // pred_fallthru
    _
  // Predicated region
  $region34: #{yolo_forward_device.1} parent=0 // pred_check
    _
  $region35: #{yolo_forward_device.1} parent=0 // pred_check_branch
    %31 = sbr.rel (0) target = $region37
  $region36: #{yolo_forward_device.1} parent=0 // pred_region
    _
  $region37: #{yolo_forward_device.1} parent=0 // pred_fallthru
    _
  %v32 = vld [vmem:[%s0] sm:$0xff]
  %v33 = vld [vmem:[%s0 + $0x8] sm:$0xff]
  %v34 = vld [vmem:[%s0 + $0x10] sm:$0xff]
  %v35 = vld [vmem:[%s0 + $0x18] sm:$0xff]
  %v36 = vld [vmem:[%s0 + $0x20] sm:$0xff]
  %v37 = vld [vmem:[%s0 + $0x28] sm:$0xff]
  %v38 = vld [vmem:[%s0 + $0x30] sm:$0xff]
  %v39 = vld [vmem:[%s0 + $0x38] sm:$0xff]
  %v40 = vld [vmem:[%s0 + $0x40] sm:$0xff]
  %v41 = vld [vmem:[%s0 + $0x48] sm:$0xff]
  %v42 = vld [vmem:[%s0 + $0x50] sm:$0xff]
  %v43 = vld [vmem:[%s0 + $0x58] sm:$0xff]
  %v44 = vld [vmem:[%s0 + $0x60] sm:$0xff]
  %v45 = vld [vmem:[%s0 + $0x68] sm:$0xff]
  %v46 = vld [vmem:[%s0 + $0x70] sm:$0xff]
  %v47 = vld [vmem:[%s0 + $0x78] sm:$0xff]
  %v48 = vld [vmem:[%s0 + $0x80] sm:$0xff]
  %v49 = vld [vmem:[%s0 + $0x88] sm:$0xff]
  %v50 = vld [vmem:[%s0 + $0x90] sm:$0xff]
  %v51 = vld [vmem:[%s0 + $0x98] sm:$0xff]
  %v52 = vld [vmem:[%s1] sm:$0xff]
  %v53 = vld [vmem:[%s2] sm:$0x1]
  %v55 = vlaneseq
  %v56 = vshrl.u32 %v55, 7
  %v57 = vsub.s32 0, %v56
  %v58 = vrot.slane %v53, %v57
  %vm60 = vcmask 64512
  %v62 = vsel %vm60, %v32, 0
  %v65 = vsel %vm60, %v33, 0
  %v68 = vsel %vm60, %v34, 0
  %v71 = vsel %vm60, %v35, 0
  %v74 = vsel %vm60, %v36, 0
  %v77 = vsel %vm60, %v37, 0
  %v80 = vsel %vm60, %v38, 0
  %v83 = vsel %vm60, %v39, 0
  %v86 = vsel %vm60, %v40, 0
  %v89 = vsel %vm60, %v41, 0
  %v92 = vsel %vm60, %v42, 0
  %v95 = vsel %vm60, %v43, 0
  %v98 = vsel %vm60, %v44, 0
  %v101 = vsel %vm60, %v45, 0
  %v104 = vsel %vm60, %v46, 0
  %v107 = vsel %vm60, %v47, 0
  %v110 = vsel %vm60, %v48, 0
  %v113 = vsel %vm60, %v49, 0
  %v116 = vsel %vm60, %v50, 0
  %v119 = vsel %vm60, %v51, 0
  %121 = vmatprep.subr.mxu0 0.0
  %122 = vmatpush1.msra.mxu0 %v52
  %123 = vmatprep.subr.mxu0 0.0
  %124 = vmatpush1.msra.mxu0 0.0
  %125 = vmatprep.subr.mxu0 0.0
  %126 = vmatpush1.msra.mxu0 0.0
  %127 = vmatprep.subr.mxu0 0.0
  %128 = vmatpush1.msra.mxu0 0.0
  %129 = vmatprep.subr.mxu0 0.0
  %130 = vmatpush1.msra.mxu0 0.0
  %131 = vmatprep.subr.mxu0 0.0
  %132 = vmatpush1.msra.mxu0 0.0
  %133 = vmatprep.subr.mxu0 0.0
  %134 = vmatpush1.msra.mxu0 0.0
  %135 = vmatprep.subr.mxu0 0.0
  %136 = vmatpush1.msra.mxu0 0.0
  %137 = vmatprep.subr.mxu0 0.0
  %138 = vmatpush1.msra.mxu0 0.0
  %139 = vmatprep.subr.mxu0 0.0
  %140 = vmatpush1.msra.mxu0 0.0
  %141 = vmatprep.subr.mxu0 0.0
  %142 = vmatpush1.msra.mxu0 0.0
  %143 = vmatprep.subr.mxu0 0.0
  %144 = vmatpush1.msra.mxu0 0.0
  %145 = vmatprep.subr.mxu0 0.0
  %146 = vmatpush1.msra.mxu0 0.0
  %147 = vmatprep.subr.mxu0 0.0
  %148 = vmatpush1.msra.mxu0 0.0
  %149 = vmatprep.subr.mxu0 0.0
  %150 = vmatpush1.msra.mxu0 0.0
  %151 = vmatprep.subr.mxu0 0.0
  %152 = vmatpush1.msra.mxu0 0.0
  %153 = vmatprep.subr.mxu0 0.0
  %154 = vmatpush1.msra.mxu0 0.0
  %155 = vmatprep.subr.mxu0 0.0
  %156 = vmatpush1.msra.mxu0 0.0
  %157 = vmatprep.subr.mxu0 0.0
  %158 = vmatpush1.msra.mxu0 0.0
  %159 = vmatprep.subr.mxu0 0.0
  %160 = vmatpush1.msra.mxu0 0.0
  %161 = vmatprep.subr.mxu0 0.0
  %162 = vmatpush1.msra.mxu0 0.0
  %163 = vmatprep.subr.mxu0 0.0
  %164 = vmatpush1.msra.mxu0 0.0
  %165 = vmatprep.subr.mxu0 0.0
  %166 = vmatpush1.msra.mxu0 0.0
  %167 = vmatprep.subr.mxu0 0.0
  %168 = vmatpush1.msra.mxu0 0.0
  %169 = vmatprep.subr.mxu0 0.0
  %170 = vmatpush1.msra.mxu0 0.0
  %171 = vmatprep.subr.mxu0 0.0
  %172 = vmatpush1.msra.mxu0 0.0
  %173 = vmatprep.subr.mxu0 0.0
  %174 = vmatpush1.msra.mxu0 0.0
  %175 = vmatprep.subr.mxu0 0.0
  %176 = vmatpush1.msra.mxu0 0.0
  %177 = vmatprep.subr.mxu0 0.0
  %178 = vmatpush1.msra.mxu0 0.0
  %179 = vmatprep.subr.mxu0 0.0
  %180 = vmatpush1.msra.mxu0 0.0
  %181 = vmatprep.subr.mxu0 0.0
  %182 = vmatpush1.msra.mxu0 0.0
  %183 = vmatprep.subr.mxu0 0.0
  %184 = vmatpush1.msra.mxu0 0.0
  %185 = vmatprep.mubr.f32.mxu0 0.0
  %186 = vmatmul.mubr.f32.gmra.mrb[0].mxu0 %v62
  %v187 = vpop.f32.mrb[0].mxu0
  %v188 = vadd.f32 %v58, %v187
  %v189 = vpop.f32.mrb[0].mxu0
  %190 = vmatprep.mubr.f32.mxu0 0.0
  %191 = vmatmul.mubr.f32.gmra.mrb[0].mxu0 %v65
  %v192 = vpop.f32.mrb[0].mxu0
  %v193 = vadd.f32 %v58, %v192
  %v194 = vpop.f32.mrb[0].mxu0
  %195 = vmatprep.mubr.f32.mxu0 0.0
  %196 = vmatmul.mubr.f32.gmra.mrb[0].mxu0 %v68
  %v197 = vpop.f32.mrb[0].mxu0
  %v198 = vadd.f32 %v58, %v197
  %v199 = vpop.f32.mrb[0].mxu0
  %200 = vmatprep.mubr.f32.mxu0 0.0
  %201 = vmatmul.mubr.f32.gmra.mrb[0].mxu0 %v71
  %v202 = vpop.f32.mrb[0].mxu0
  %v203 = vadd.f32 %v58, %v202
  %v204 = vpop.f32.mrb[0].mxu0
  %205 = vmatprep.mubr.f32.mxu0 0.0
  %206 = vmatmul.mubr.f32.gmra.mrb[0].mxu0 %v74
  %v207 = vpop.f32.mrb[0].mxu0
  %v208 = vadd.f32 %v58, %v207
  %v209 = vpop.f32.mrb[0].mxu0
  %210 = vmatprep.mubr.f32.mxu0 0.0
  %211 = vmatmul.mubr.f32.gmra.mrb[0].mxu0 %v77
  %v212 = vpop.f32.mrb[0].mxu0
  %v213 = vadd.f32 %v58, %v212
  %v214 = vpop.f32.mrb[0].mxu0
  %215 = vmatprep.mubr.f32.mxu0 0.0
  %216 = vmatmul.mubr.f32.gmra.mrb[0].mxu0 %v80
  %v217 = vpop.f32.mrb[0].mxu0
  %v218 = vadd.f32 %v58, %v217
  %v219 = vpop.f32.mrb[0].mxu0
  %220 = vmatprep.mubr.f32.mxu0 0.0
  %221 = vmatmul.mubr.f32.gmra.mrb[0].mxu0 %v83
  %v222 = vpop.f32.mrb[0].mxu0
  %v223 = vadd.f32 %v58, %v222
  %v224 = vpop.f32.mrb[0].mxu0
  %225 = vmatprep.mubr.f32.mxu0 0.0
  %226 = vmatmul.mubr.f32.gmra.mrb[0].mxu0 %v86
  %v227 = vpop.f32.mrb[0].mxu0
  %v228 = vadd.f32 %v58, %v227
  %v229 = vpop.f32.mrb[0].mxu0
  %230 = vmatprep.mubr.f32.mxu0 0.0
  %231 = vmatmul.mubr.f32.gmra.mrb[0].mxu0 %v89
  %v232 = vpop.f32.mrb[0].mxu0
  %v233 = vadd.f32 %v58, %v232
  %v234 = vpop.f32.mrb[0].mxu0
  %235 = vmatprep.mubr.f32.mxu0 0.0
  %236 = vmatmul.mubr.f32.gmra.mrb[0].mxu0 %v92
  %v237 = vpop.f32.mrb[0].mxu0
  %v238 = vadd.f32 %v58, %v237
  %v239 = vpop.f32.mrb[0].mxu0
  %240 = vmatprep.mubr.f32.mxu0 0.0
  %241 = vmatmul.mubr.f32.gmra.mrb[0].mxu0 %v95
  %v242 = vpop.f32.mrb[0].mxu0
  %v243 = vadd.f32 %v58, %v242
  %v244 = vpop.f32.mrb[0].mxu0
  %245 = vmatprep.mubr.f32.mxu0 0.0
  %246 = vmatmul.mubr.f32.gmra.mrb[0].mxu0 %v98
  %v247 = vpop.f32.mrb[0].mxu0
  %v248 = vadd.f32 %v58, %v247
  %v249 = vpop.f32.mrb[0].mxu0
  %250 = vmatprep.mubr.f32.mxu0 0.0
  %251 = vmatmul.mubr.f32.gmra.mrb[0].mxu0 %v101
  %v252 = vpop.f32.mrb[0].mxu0
  %v253 = vadd.f32 %v58, %v252
  %v254 = vpop.f32.mrb[0].mxu0
  %255 = vmatprep.mubr.f32.mxu0 0.0
  %256 = vmatmul.mubr.f32.gmra.mrb[0].mxu0 %v104
  %v257 = vpop.f32.mrb[0].mxu0
  %v258 = vadd.f32 %v58, %v257
  %v259 = vpop.f32.mrb[0].mxu0
  %260 = vmatprep.mubr.f32.mxu0 0.0
  %261 = vmatmul.mubr.f32.gmra.mrb[0].mxu0 %v107
  %v262 = vpop.f32.mrb[0].mxu0
  %v263 = vadd.f32 %v58, %v262
  %v264 = vpop.f32.mrb[0].mxu0
  %265 = vmatprep.mubr.f32.mxu0 0.0
  %266 = vmatmul.mubr.f32.gmra.mrb[0].mxu0 %v110
  %v267 = vpop.f32.mrb[0].mxu0
  %v268 = vadd.f32 %v58, %v267
  %v269 = vpop.f32.mrb[0].mxu0
  %270 = vmatprep.mubr.f32.mxu0 0.0
  %271 = vmatmul.mubr.f32.gmra.mrb[0].mxu0 %v113
  %v272 = vpop.f32.mrb[0].mxu0
  %v273 = vadd.f32 %v58, %v272
  %v274 = vpop.f32.mrb[0].mxu0
  %275 = vmatprep.mubr.f32.mxu0 0.0
  %276 = vmatmul.mubr.f32.gmra.mrb[0].mxu0 %v116
  %v277 = vpop.f32.mrb[0].mxu0
  %v278 = vadd.f32 %v58, %v277
  %v279 = vpop.f32.mrb[0].mxu0
  %280 = vmatprep.mubr.f32.mxu0 0.0
  %281 = vmatmul.mubr.f32.gmra.mrb[0].mxu0 %v119
  %v282 = vpop.f32.mrb[0].mxu0
  %v283 = vadd.f32 %v58, %v282
  %v284 = vpop.f32.mrb[0].mxu0
  %285 = vdwg.mxu0
  %v286 = vmax.f32 %v188, 0.0
  %v287 = vmax.f32 %v193, 0.0
  %v288 = vmax.f32 %v198, 0.0
  %v289 = vmax.f32 %v203, 0.0
  %v290 = vmax.f32 %v208, 0.0
  %v291 = vmax.f32 %v213, 0.0
  %v292 = vmax.f32 %v218, 0.0
  %v293 = vmax.f32 %v223, 0.0
  %v294 = vmax.f32 %v228, 0.0
  %v295 = vmax.f32 %v233, 0.0
  %v296 = vmax.f32 %v238, 0.0
  %v297 = vmax.f32 %v243, 0.0
  %v298 = vmax.f32 %v248, 0.0
  %v299 = vmax.f32 %v253, 0.0
  %v300 = vmax.f32 %v258, 0.0
  %v301 = vmax.f32 %v263, 0.0
  %v302 = vmax.f32 %v268, 0.0
  %v303 = vmax.f32 %v273, 0.0
  %v304 = vmax.f32 %v278, 0.0
  %v305 = vmax.f32 %v283, 0.0
  %v306 = vld [vmem:[%s3] sm:$0xff]
  %v307 = vld [vmem:[%s3 + $0x8] sm:$0xff]
  %v308 = vld [vmem:[%s3 + $0x10] sm:$0xff]
  %v309 = vld [vmem:[%s3 + $0x18] sm:$0xff]
  %v310 = vld [vmem:[%s4] sm:$0x1]
  %v312 = vlaneseq
  %v313 = vshrl.u32 %v312, 7
  %v314 = vsub.s32 0, %v313
  %v315 = vrot.slane %v310, %v314
  %vm317 = vcmask 261120
  %v319 = vsel %vm317, %v286, 0
  %v322 = vsel %vm317, %v287, 0
  %v325 = vsel %vm317, %v288, 0
  %v328 = vsel %vm317, %v289, 0
  %v331 = vsel %vm317, %v290, 0
  %v334 = vsel %vm317, %v291, 0
  %v337 = vsel %vm317, %v292, 0
  %v340 = vsel %vm317, %v293, 0
  %v343 = vsel %vm317, %v294, 0
  %v346 = vsel %vm317, %v295, 0
  %v349 = vsel %vm317, %v296, 0
  %v352 = vsel %vm317, %v297, 0
  %v355 = vsel %vm317, %v298, 0
  %v358 = vsel %vm317, %v299, 0
  %v361 = vsel %vm317, %v300, 0
  %v364 = vsel %vm317, %v301, 0
  %v367 = vsel %vm317, %v302, 0
  %v370 = vsel %vm317, %v303, 0
  %v373 = vsel %vm317, %v304, 0
  %v376 = vsel %vm317, %v305, 0
  %378 = vmatprep.subr.mxu0 0.0
  %379 = vmatpush1.msra.mxu0 %v306
  %380 = vmatprep.subr.mxu0 0.0
  %381 = vmatpush1.msra.mxu0 %v307
  %382 = vmatprep.subr.mxu0 0.0
  %383 = vmatpush1.msra.mxu0 %v308
  %384 = vmatprep.subr.mxu0 0.0
  %385 = vmatpush1.msra.mxu0 %v309
  %386 = vmatprep.subr.mxu0 0.0
  %387 = vmatpush1.msra.mxu0 0.0
  %388 = vmatprep.subr.mxu0 0.0
  %389 = vmatpush1.msra.mxu0 0.0
  %390 = vmatprep.subr.mxu0 0.0
  %391 = vmatpush1.msra.mxu0 0.0
  %392 = vmatprep.subr.mxu0 0.0
  %393 = vmatpush1.msra.mxu0 0.0
  %394 = vmatprep.subr.mxu0 0.0
  %395 = vmatpush1.msra.mxu0 0.0
  %396 = vmatprep.subr.mxu0 0.0
  %397 = vmatpush1.msra.mxu0 0.0
  %398 = vmatprep.subr.mxu0 0.0
  %399 = vmatpush1.msra.mxu0 0.0
  %400 = vmatprep.subr.mxu0 0.0
  %401 = vmatpush1.msra.mxu0 0.0
  %402 = vmatprep.subr.mxu0 0.0
  %403 = vmatpush1.msra.mxu0 0.0
  %404 = vmatprep.subr.mxu0 0.0
  %405 = vmatpush1.msra.mxu0 0.0
  %406 = vmatprep.subr.mxu0 0.0
  %407 = vmatpush1.msra.mxu0 0.0
  %408 = vmatprep.subr.mxu0 0.0
  %409 = vmatpush1.msra.mxu0 0.0
  %410 = vmatprep.subr.mxu0 0.0
  %411 = vmatpush1.msra.mxu0 0.0
  %412 = vmatprep.subr.mxu0 0.0
  %413 = vmatpush1.msra.mxu0 0.0
  %414 = vmatprep.subr.mxu0 0.0
  %415 = vmatpush1.msra.mxu0 0.0
  %416 = vmatprep.subr.mxu0 0.0
  %417 = vmatpush1.msra.mxu0 0.0
  %418 = vmatprep.subr.mxu0 0.0
  %419 = vmatpush1.msra.mxu0 0.0
  %420 = vmatprep.subr.mxu0 0.0
  %421 = vmatpush1.msra.mxu0 0.0
  %422 = vmatprep.subr.mxu0 0.0
  %423 = vmatpush1.msra.mxu0 0.0
  %424 = vmatprep.subr.mxu0 0.0
  %425 = vmatpush1.msra.mxu0 0.0
  %426 = vmatprep.subr.mxu0 0.0
  %427 = vmatpush1.msra.mxu0 0.0
  %428 = vmatprep.subr.mxu0 0.0
  %429 = vmatpush1.msra.mxu0 0.0
  %430 = vmatprep.subr.mxu0 0.0
  %431 = vmatpush1.msra.mxu0 0.0
  %432 = vmatprep.subr.mxu0 0.0
  %433 = vmatpush1.msra.mxu0 0.0
  %434 = vmatprep.subr.mxu0 0.0
  %435 = vmatpush1.msra.mxu0 0.0
  %436 = vmatprep.subr.mxu0 0.0
  %437 = vmatpush1.msra.mxu0 0.0
  %438 = vmatprep.subr.mxu0 0.0
  %439 = vmatpush1.msra.mxu0 0.0
  %440 = vmatprep.subr.mxu0 0.0
  %441 = vmatpush1.msra.mxu0 0.0
  %442 = vmatprep.mubr.f32.mxu0 0.0
  %443 = vmatmul.mubr.f32.gmra.mrb[0].mxu0 %v319
  %v444 = vpop.f32.mrb[0].mxu0
  %v445 = vadd.f32 %v315, %v444
  %v446 = vpop.f32.mrb[0].mxu0
  %447 = vmatprep.mubr.f32.mxu0 0.0
  %448 = vmatmul.mubr.f32.gmra.mrb[0].mxu0 %v322
  %v449 = vpop.f32.mrb[0].mxu0
  %v450 = vadd.f32 %v315, %v449
  %v451 = vpop.f32.mrb[0].mxu0
  %452 = vmatprep.mubr.f32.mxu0 0.0
  %453 = vmatmul.mubr.f32.gmra.mrb[0].mxu0 %v325
  %v454 = vpop.f32.mrb[0].mxu0
  %v455 = vadd.f32 %v315, %v454
  %v456 = vpop.f32.mrb[0].mxu0
  %457 = vmatprep.mubr.f32.mxu0 0.0
  %458 = vmatmul.mubr.f32.gmra.mrb[0].mxu0 %v328
  %v459 = vpop.f32.mrb[0].mxu0
  %v460 = vadd.f32 %v315, %v459
  %v461 = vpop.f32.mrb[0].mxu0
  %462 = vmatprep.mubr.f32.mxu0 0.0
  %463 = vmatmul.mubr.f32.gmra.mrb[0].mxu0 %v331
  %v464 = vpop.f32.mrb[0].mxu0
  %v465 = vadd.f32 %v315, %v464
  %v466 = vpop.f32.mrb[0].mxu0
  %467 = vmatprep.mubr.f32.mxu0 0.0
  %468 = vmatmul.mubr.f32.gmra.mrb[0].mxu0 %v334
  %v469 = vpop.f32.mrb[0].mxu0
  %v470 = vadd.f32 %v315, %v469
  %v471 = vpop.f32.mrb[0].mxu0
  %472 = vmatprep.mubr.f32.mxu0 0.0
  %473 = vmatmul.mubr.f32.gmra.mrb[0].mxu0 %v337
  %v474 = vpop.f32.mrb[0].mxu0
  %v475 = vadd.f32 %v315, %v474
  %v476 = vpop.f32.mrb[0].mxu0
  %477 = vmatprep.mubr.f32.mxu0 0.0
  %478 = vmatmul.mubr.f32.gmra.mrb[0].mxu0 %v340
  %v479 = vpop.f32.mrb[0].mxu0
  %v480 = vadd.f32 %v315, %v479
  %v481 = vpop.f32.mrb[0].mxu0
  %482 = vmatprep.mubr.f32.mxu0 0.0
  %483 = vmatmul.mubr.f32.gmra.mrb[0].mxu0 %v343
  %v484 = vpop.f32.mrb[0].mxu0
  %v485 = vadd.f32 %v315, %v484
  %v486 = vpop.f32.mrb[0].mxu0
  %487 = vmatprep.mubr.f32.mxu0 0.0
  %488 = vmatmul.mubr.f32.gmra.mrb[0].mxu0 %v346
  %v489 = vpop.f32.mrb[0].mxu0
  %v490 = vadd.f32 %v315, %v489
  %v491 = vpop.f32.mrb[0].mxu0
  %492 = vmatprep.mubr.f32.mxu0 0.0
  %493 = vmatmul.mubr.f32.gmra.mrb[0].mxu0 %v349
  %v494 = vpop.f32.mrb[0].mxu0
  %v495 = vadd.f32 %v315, %v494
  %v496 = vpop.f32.mrb[0].mxu0
  %497 = vmatprep.mubr.f32.mxu0 0.0
  %498 = vmatmul.mubr.f32.gmra.mrb[0].mxu0 %v352
  %v499 = vpop.f32.mrb[0].mxu0
  %v500 = vadd.f32 %v315, %v499
  %v501 = vpop.f32.mrb[0].mxu0
  %502 = vmatprep.mubr.f32.mxu0 0.0
  %503 = vmatmul.mubr.f32.gmra.mrb[0].mxu0 %v355
  %v504 = vpop.f32.mrb[0].mxu0
  %v505 = vadd.f32 %v315, %v504
  %v506 = vpop.f32.mrb[0].mxu0
  %507 = vmatprep.mubr.f32.mxu0 0.0
  %508 = vmatmul.mubr.f32.gmra.mrb[0].mxu0 %v358
  %v509 = vpop.f32.mrb[0].mxu0
  %v510 = vadd.f32 %v315, %v509
  %v511 = vpop.f32.mrb[0].mxu0
  %512 = vmatprep.mubr.f32.mxu0 0.0
  %513 = vmatmul.mubr.f32.gmra.mrb[0].mxu0 %v361
  %v514 = vpop.f32.mrb[0].mxu0
  %v515 = vadd.f32 %v315, %v514
  %v516 = vpop.f32.mrb[0].mxu0
  %517 = vmatprep.mubr.f32.mxu0 0.0
  %518 = vmatmul.mubr.f32.gmra.mrb[0].mxu0 %v364
  %v519 = vpop.f32.mrb[0].mxu0
  %v520 = vadd.f32 %v315, %v519
  %v521 = vpop.f32.mrb[0].mxu0
  %522 = vmatprep.mubr.f32.mxu0 0.0
  %523 = vmatmul.mubr.f32.gmra.mrb[0].mxu0 %v367
  %v524 = vpop.f32.mrb[0].mxu0
  %v525 = vadd.f32 %v315, %v524
  %v526 = vpop.f32.mrb[0].mxu0
  %527 = vmatprep.mubr.f32.mxu0 0.0
  %528 = vmatmul.mubr.f32.gmra.mrb[0].mxu0 %v370
  %v529 = vpop.f32.mrb[0].mxu0
  %v530 = vadd.f32 %v315, %v529
  %v531 = vpop.f32.mrb[0].mxu0
  %532 = vmatprep.mubr.f32.mxu0 0.0
  %533 = vmatmul.mubr.f32.gmra.mrb[0].mxu0 %v373
  %v534 = vpop.f32.mrb[0].mxu0
  %v535 = vadd.f32 %v315, %v534
  %v536 = vpop.f32.mrb[0].mxu0
  %537 = vmatprep.mubr.f32.mxu0 0.0
  %538 = vmatmul.mubr.f32.gmra.mrb[0].mxu0 %v376
  %v539 = vpop.f32.mrb[0].mxu0
  %v540 = vadd.f32 %v315, %v539
  %v541 = vpop.f32.mrb[0].mxu0
  %542 = vdwg.mxu0
  %v543 = vld [vmem:[%s5] sm:$0xff]
  %v544 = vld [vmem:[%s5 + $0x8] sm:$0xff]
  %v545 = vld [vmem:[%s5 + $0x10] sm:$0xff]
  %v546 = vld [vmem:[%s5 + $0x18] sm:$0xff]
  %v547 = vld [vmem:[%s6] sm:$0x1]
  %v549 = vlaneseq
  %v550 = vshrl.u32 %v549, 7
  %v551 = vsub.s32 0, %v550
  %v552 = vrot.slane %v547, %v551
  %554 = vmatprep.subr.mxu0 0.0
  %555 = vmatpush1.msra.mxu0 %v543
  %556 = vmatprep.subr.mxu0 0.0
  %557 = vmatpush1.msra.mxu0 %v544
  %558 = vmatprep.subr.mxu0 0.0
  %559 = vmatpush1.msra.mxu0 %v545
  %560 = vmatprep.subr.mxu0 0.0
  %561 = vmatpush1.msra.mxu0 %v546
  %562 = vmatprep.subr.mxu0 0.0
  %563 = vmatpush1.msra.mxu0 0.0
  %564 = vmatprep.subr.mxu0 0.0
  %565 = vmatpush1.msra.mxu0 0.0
  %566 = vmatprep.subr.mxu0 0.0
  %567 = vmatpush1.msra.mxu0 0.0
  %568 = vmatprep.subr.mxu0 0.0
  %569 = vmatpush1.msra.mxu0 0.0
  %570 = vmatprep.subr.mxu0 0.0
  %571 = vmatpush1.msra.mxu0 0.0
  %572 = vmatprep.subr.mxu0 0.0
  %573 = vmatpush1.msra.mxu0 0.0
  %574 = vmatprep.subr.mxu0 0.0
  %575 = vmatpush1.msra.mxu0 0.0
  %576 = vmatprep.subr.mxu0 0.0
  %577 = vmatpush1.msra.mxu0 0.0
  %578 = vmatprep.subr.mxu0 0.0
  %579 = vmatpush1.msra.mxu0 0.0
  %580 = vmatprep.subr.mxu0 0.0
  %581 = vmatpush1.msra.mxu0 0.0
  %582 = vmatprep.subr.mxu0 0.0
  %583 = vmatpush1.msra.mxu0 0.0
  %584 = vmatprep.subr.mxu0 0.0
  %585 = vmatpush1.msra.mxu0 0.0
  %586 = vmatprep.subr.mxu0 0.0
  %587 = vmatpush1.msra.mxu0 0.0
  %588 = vmatprep.subr.mxu0 0.0
  %589 = vmatpush1.msra.mxu0 0.0
  %590 = vmatprep.subr.mxu0 0.0
  %591 = vmatpush1.msra.mxu0 0.0
  %592 = vmatprep.subr.mxu0 0.0
  %593 = vmatpush1.msra.mxu0 0.0
  %594 = vmatprep.subr.mxu0 0.0
  %595 = vmatpush1.msra.mxu0 0.0
  %596 = vmatprep.subr.mxu0 0.0
  %597 = vmatpush1.msra.mxu0 0.0
  %598 = vmatprep.subr.mxu0 0.0
  %599 = vmatpush1.msra.mxu0 0.0
  %600 = vmatprep.subr.mxu0 0.0
  %601 = vmatpush1.msra.mxu0 0.0
  %602 = vmatprep.subr.mxu0 0.0
  %603 = vmatpush1.msra.mxu0 0.0
  %604 = vmatprep.subr.mxu0 0.0
  %605 = vmatpush1.msra.mxu0 0.0
  %606 = vmatprep.subr.mxu0 0.0
  %607 = vmatpush1.msra.mxu0 0.0
  %608 = vmatprep.subr.mxu0 0.0
  %609 = vmatpush1.msra.mxu0 0.0
  %610 = vmatprep.subr.mxu0 0.0
  %611 = vmatpush1.msra.mxu0 0.0
  %612 = vmatprep.subr.mxu0 0.0
  %613 = vmatpush1.msra.mxu0 0.0
  %614 = vmatprep.subr.mxu0 0.0
  %615 = vmatpush1.msra.mxu0 0.0
  %616 = vmatprep.subr.mxu0 0.0
  %617 = vmatpush1.msra.mxu0 0.0
  %618 = vmatprep.mubr.f32.mxu0 0.0
  %619 = vmatmul.mubr.f32.gmra.mrb[0].mxu0 %v319
  %v620 = vpop.f32.mrb[0].mxu0
  %v621 = vadd.f32 %v552, %v620
  %v622 = vpop.f32.mrb[0].mxu0
  %623 = vmatprep.mubr.f32.mxu0 0.0
  %624 = vmatmul.mubr.f32.gmra.mrb[0].mxu0 %v322
  %v625 = vpop.f32.mrb[0].mxu0
  %v626 = vadd.f32 %v552, %v625
  %v627 = vpop.f32.mrb[0].mxu0
  %628 = vmatprep.mubr.f32.mxu0 0.0
  %629 = vmatmul.mubr.f32.gmra.mrb[0].mxu0 %v325
  %v630 = vpop.f32.mrb[0].mxu0
  %v631 = vadd.f32 %v552, %v630
  %v632 = vpop.f32.mrb[0].mxu0
  %633 = vmatprep.mubr.f32.mxu0 0.0
  %634 = vmatmul.mubr.f32.gmra.mrb[0].mxu0 %v328
  %v635 = vpop.f32.mrb[0].mxu0
  %v636 = vadd.f32 %v552, %v635
  %v637 = vpop.f32.mrb[0].mxu0
  %638 = vmatprep.mubr.f32.mxu0 0.0
  %639 = vmatmul.mubr.f32.gmra.mrb[0].mxu0 %v331
  %v640 = vpop.f32.mrb[0].mxu0
  %v641 = vadd.f32 %v552, %v640
  %v642 = vpop.f32.mrb[0].mxu0
  %643 = vmatprep.mubr.f32.mxu0 0.0
  %644 = vmatmul.mubr.f32.gmra.mrb[0].mxu0 %v334
  %v645 = vpop.f32.mrb[0].mxu0
  %v646 = vadd.f32 %v552, %v645
  %v647 = vpop.f32.mrb[0].mxu0
  %648 = vmatprep.mubr.f32.mxu0 0.0
  %649 = vmatmul.mubr.f32.gmra.mrb[0].mxu0 %v337
  %v650 = vpop.f32.mrb[0].mxu0
  %v651 = vadd.f32 %v552, %v650
  %v652 = vpop.f32.mrb[0].mxu0
  %653 = vmatprep.mubr.f32.mxu0 0.0
  %654 = vmatmul.mubr.f32.gmra.mrb[0].mxu0 %v340
  %v655 = vpop.f32.mrb[0].mxu0
  %v656 = vadd.f32 %v552, %v655
  %v657 = vpop.f32.mrb[0].mxu0
  %658 = vmatprep.mubr.f32.mxu0 0.0
  %659 = vmatmul.mubr.f32.gmra.mrb[0].mxu0 %v343
  %v660 = vpop.f32.mrb[0].mxu0
  %v661 = vadd.f32 %v552, %v660
  %v662 = vpop.f32.mrb[0].mxu0
  %663 = vmatprep.mubr.f32.mxu0 0.0
  %664 = vmatmul.mubr.f32.gmra.mrb[0].mxu0 %v346
  %v665 = vpop.f32.mrb[0].mxu0
  %v666 = vadd.f32 %v552, %v665
  %v667 = vpop.f32.mrb[0].mxu0
  %668 = vmatprep.mubr.f32.mxu0 0.0
  %669 = vmatmul.mubr.f32.gmra.mrb[0].mxu0 %v349
  %v670 = vpop.f32.mrb[0].mxu0
  %v671 = vadd.f32 %v552, %v670
  %v672 = vpop.f32.mrb[0].mxu0
  %673 = vmatprep.mubr.f32.mxu0 0.0
  %674 = vmatmul.mubr.f32.gmra.mrb[0].mxu0 %v352
  %v675 = vpop.f32.mrb[0].mxu0
  %v676 = vadd.f32 %v552, %v675
  %v677 = vpop.f32.mrb[0].mxu0
  %678 = vmatprep.mubr.f32.mxu0 0.0
  %679 = vmatmul.mubr.f32.gmra.mrb[0].mxu0 %v355
  %v680 = vpop.f32.mrb[0].mxu0
  %v681 = vadd.f32 %v552, %v680
  %v682 = vpop.f32.mrb[0].mxu0
  %683 = vmatprep.mubr.f32.mxu0 0.0
  %684 = vmatmul.mubr.f32.gmra.mrb[0].mxu0 %v358
  %v685 = vpop.f32.mrb[0].mxu0
  %v686 = vadd.f32 %v552, %v685
  %v687 = vpop.f32.mrb[0].mxu0
  %688 = vmatprep.mubr.f32.mxu0 0.0
  %689 = vmatmul.mubr.f32.gmra.mrb[0].mxu0 %v361
  %v690 = vpop.f32.mrb[0].mxu0
  %v691 = vadd.f32 %v552, %v690
  %v692 = vpop.f32.mrb[0].mxu0
  %693 = vmatprep.mubr.f32.mxu0 0.0
  %694 = vmatmul.mubr.f32.gmra.mrb[0].mxu0 %v364
  %v695 = vpop.f32.mrb[0].mxu0
  %v696 = vadd.f32 %v552, %v695
  %v697 = vpop.f32.mrb[0].mxu0
  %698 = vmatprep.mubr.f32.mxu0 0.0
  %699 = vmatmul.mubr.f32.gmra.mrb[0].mxu0 %v367
  %v700 = vpop.f32.mrb[0].mxu0
  %v701 = vadd.f32 %v552, %v700
  %v702 = vpop.f32.mrb[0].mxu0
  %703 = vmatprep.mubr.f32.mxu0 0.0
  %704 = vmatmul.mubr.f32.gmra.mrb[0].mxu0 %v370
  %v705 = vpop.f32.mrb[0].mxu0
  %v706 = vadd.f32 %v552, %v705
  %v707 = vpop.f32.mrb[0].mxu0
  %708 = vmatprep.mubr.f32.mxu0 0.0
  %709 = vmatmul.mubr.f32.gmra.mrb[0].mxu0 %v373
  %v710 = vpop.f32.mrb[0].mxu0
  %v711 = vadd.f32 %v552, %v710
  %v712 = vpop.f32.mrb[0].mxu0
  %713 = vmatprep.mubr.f32.mxu0 0.0
  %714 = vmatmul.mubr.f32.gmra.mrb[0].mxu0 %v376
  %v715 = vpop.f32.mrb[0].mxu0
  %v716 = vadd.f32 %v552, %v715
  %v717 = vpop.f32.mrb[0].mxu0
  %718 = vdwg.mxu0
  %v719 = vlaneseq
  %v720 = vshrl.u32 %v719, 7
  %v721 = vadd.s32 %v720, 8
  %v722 = vadd.s32 %v720, 16
  %v723 = vadd.s32 %v720, 24
  %v724 = vadd.s32 %v720, 32
  %v725 = vadd.s32 %v720, 40
  %v726 = vadd.s32 %v720, 48
  %v727 = vadd.s32 %v720, 56
  %v728 = vadd.s32 %v720, 64
  %v729 = vadd.s32 %v720, 72
  %v730 = vadd.s32 %v720, 80
  %v731 = vadd.s32 %v720, 88
  %v732 = vadd.s32 %v720, 96
  %v733 = vadd.s32 %v720, 104
  %v734 = vadd.s32 %v720, 112
  %v735 = vadd.s32 %v720, 120
  %v736 = vadd.s32 %v720, 128
  %v737 = vadd.s32 %v720, 136
  %v738 = vadd.s32 %v720, 144
  %v739 = vadd.s32 %v720, 152
  %vm740 = vcmp.lt.s32.totalorder %v720, 0
  %v741 = vsub.s32 0, %v720
  %v742 = vsel %vm740, %v741, %v720
  %v743 = vmul.u32.u64.compose %v742, 3435973837
  %v744 = vextract.low.u32 %v743
  %v745 = vextract.high.u32 %v743
  %v746 = vshrl.u32 %v745, 6
  %v747 = vmul.u32 %v746, 80
  %v748 = vsub.s32 %v742, %v747
  %v749 = vsub.s32 0, %v748
  %v750 = vsel %vm740, %v749, %v748
  %vm751 = vcmp.lt.s32.totalorder %v721, 0
  %v752 = vsub.s32 0, %v721
  %v753 = vsel %vm751, %v752, %v721
  %v754 = vmul.u32.u64.compose %v753, 3435973837
  %v755 = vextract.low.u32 %v754
  %v756 = vextract.high.u32 %v754
  %v757 = vshrl.u32 %v756, 6
  %v758 = vmul.u32 %v757, 80
  %v759 = vsub.s32 %v753, %v758
  %v760 = vsub.s32 0, %v759
  %v761 = vsel %vm751, %v760, %v759
  %vm762 = vcmp.lt.s32.totalorder %v722, 0
  %v763 = vsub.s32 0, %v722
  %v764 = vsel %vm762, %v763, %v722
  %v765 = vmul.u32.u64.compose %v764, 3435973837
  %v766 = vextract.low.u32 %v765
  %v767 = vextract.high.u32 %v765
  %v768 = vshrl.u32 %v767, 6
  %v769 = vmul.u32 %v768, 80
  %v770 = vsub.s32 %v764, %v769
  %v771 = vsub.s32 0, %v770
  %v772 = vsel %vm762, %v771, %v770
  %vm773 = vcmp.lt.s32.totalorder %v723, 0
  %v774 = vsub.s32 0, %v723
  %v775 = vsel %vm773, %v774, %v723
  %v776 = vmul.u32.u64.compose %v775, 3435973837
  %v777 = vextract.low.u32 %v776
  %v778 = vextract.high.u32 %v776
  %v779 = vshrl.u32 %v778, 6
  %v780 = vmul.u32 %v779, 80
  %v781 = vsub.s32 %v775, %v780
  %v782 = vsub.s32 0, %v781
  %v783 = vsel %vm773, %v782, %v781
  %vm784 = vcmp.lt.s32.totalorder %v724, 0
  %v785 = vsub.s32 0, %v724
  %v786 = vsel %vm784, %v785, %v724
  %v787 = vmul.u32.u64.compose %v786, 3435973837
  %v788 = vextract.low.u32 %v787
  %v789 = vextract.high.u32 %v787
  %v790 = vshrl.u32 %v789, 6
  %v791 = vmul.u32 %v790, 80
  %v792 = vsub.s32 %v786, %v791
  %v793 = vsub.s32 0, %v792
  %v794 = vsel %vm784, %v793, %v792
  %vm795 = vcmp.lt.s32.totalorder %v725, 0
  %v796 = vsub.s32 0, %v725
  %v797 = vsel %vm795, %v796, %v725
  %v798 = vmul.u32.u64.compose %v797, 3435973837
  %v799 = vextract.low.u32 %v798
  %v800 = vextract.high.u32 %v798
  %v801 = vshrl.u32 %v800, 6
  %v802 = vmul.u32 %v801, 80
  %v803 = vsub.s32 %v797, %v802
  %v804 = vsub.s32 0, %v803
  %v805 = vsel %vm795, %v804, %v803
  %vm806 = vcmp.lt.s32.totalorder %v726, 0
  %v807 = vsub.s32 0, %v726
  %v808 = vsel %vm806, %v807, %v726
  %v809 = vmul.u32.u64.compose %v808, 3435973837
  %v810 = vextract.low.u32 %v809
  %v811 = vextract.high.u32 %v809
  %v812 = vshrl.u32 %v811, 6
  %v813 = vmul.u32 %v812, 80
  %v814 = vsub.s32 %v808, %v813
  %v815 = vsub.s32 0, %v814
  %v816 = vsel %vm806, %v815, %v814
  %vm817 = vcmp.lt.s32.totalorder %v727, 0
  %v818 = vsub.s32 0, %v727
  %v819 = vsel %vm817, %v818, %v727
  %v820 = vmul.u32.u64.compose %v819, 3435973837
  %v821 = vextract.low.u32 %v820
  %v822 = vextract.high.u32 %v820
  %v823 = vshrl.u32 %v822, 6
  %v824 = vmul.u32 %v823, 80
  %v825 = vsub.s32 %v819, %v824
  %v826 = vsub.s32 0, %v825
  %v827 = vsel %vm817, %v826, %v825
  %vm828 = vcmp.lt.s32.totalorder %v728, 0
  %v829 = vsub.s32 0, %v728
  %v830 = vsel %vm828, %v829, %v728
  %v831 = vmul.u32.u64.compose %v830, 3435973837
  %v832 = vextract.low.u32 %v831
  %v833 = vextract.high.u32 %v831
  %v834 = vshrl.u32 %v833, 6
  %v835 = vmul.u32 %v834, 80
  %v836 = vsub.s32 %v830, %v835
  %v837 = vsub.s32 0, %v836
  %v838 = vsel %vm828, %v837, %v836
  %vm839 = vcmp.lt.s32.totalorder %v729, 0
  %v840 = vsub.s32 0, %v729
  %v841 = vsel %vm839, %v840, %v729
  %v842 = vmul.u32.u64.compose %v841, 3435973837
  %v843 = vextract.low.u32 %v842
  %v844 = vextract.high.u32 %v842
  %v845 = vshrl.u32 %v844, 6
  %v846 = vmul.u32 %v845, 80
  %v847 = vsub.s32 %v841, %v846
  %v848 = vsub.s32 0, %v847
  %v849 = vsel %vm839, %v848, %v847
  %vm850 = vcmp.lt.s32.totalorder %v730, 0
  %v851 = vsub.s32 0, %v730
  %v852 = vsel %vm850, %v851, %v730
  %v853 = vmul.u32.u64.compose %v852, 3435973837
  %v854 = vextract.low.u32 %v853
  %v855 = vextract.high.u32 %v853
  %v856 = vshrl.u32 %v855, 6
  %v857 = vmul.u32 %v856, 80
  %v858 = vsub.s32 %v852, %v857
  %v859 = vsub.s32 0, %v858
  %v860 = vsel %vm850, %v859, %v858
  %vm861 = vcmp.lt.s32.totalorder %v731, 0
  %v862 = vsub.s32 0, %v731
  %v863 = vsel %vm861, %v862, %v731
  %v864 = vmul.u32.u64.compose %v863, 3435973837
  %v865 = vextract.low.u32 %v864
  %v866 = vextract.high.u32 %v864
  %v867 = vshrl.u32 %v866, 6
  %v868 = vmul.u32 %v867, 80
  %v869 = vsub.s32 %v863, %v868
  %v870 = vsub.s32 0, %v869
  %v871 = vsel %vm861, %v870, %v869
  %vm872 = vcmp.lt.s32.totalorder %v732, 0
  %v873 = vsub.s32 0, %v732
  %v874 = vsel %vm872, %v873, %v732
  %v875 = vmul.u32.u64.compose %v874, 3435973837
  %v876 = vextract.low.u32 %v875
  %v877 = vextract.high.u32 %v875
  %v878 = vshrl.u32 %v877, 6
  %v879 = vmul.u32 %v878, 80
  %v880 = vsub.s32 %v874, %v879
  %v881 = vsub.s32 0, %v880
  %v882 = vsel %vm872, %v881, %v880
  %vm883 = vcmp.lt.s32.totalorder %v733, 0
  %v884 = vsub.s32 0, %v733
  %v885 = vsel %vm883, %v884, %v733
  %v886 = vmul.u32.u64.compose %v885, 3435973837
  %v887 = vextract.low.u32 %v886
  %v888 = vextract.high.u32 %v886
  %v889 = vshrl.u32 %v888, 6
  %v890 = vmul.u32 %v889, 80
  %v891 = vsub.s32 %v885, %v890
  %v892 = vsub.s32 0, %v891
  %v893 = vsel %vm883, %v892, %v891
  %vm894 = vcmp.lt.s32.totalorder %v734, 0
  %v895 = vsub.s32 0, %v734
  %v896 = vsel %vm894, %v895, %v734
  %v897 = vmul.u32.u64.compose %v896, 3435973837
  %v898 = vextract.low.u32 %v897
  %v899 = vextract.high.u32 %v897
  %v900 = vshrl.u32 %v899, 6
  %v901 = vmul.u32 %v900, 80
  %v902 = vsub.s32 %v896, %v901
  %v903 = vsub.s32 0, %v902
  %v904 = vsel %vm894, %v903, %v902
  %vm905 = vcmp.lt.s32.totalorder %v735, 0
  %v906 = vsub.s32 0, %v735
  %v907 = vsel %vm905, %v906, %v735
  %v908 = vmul.u32.u64.compose %v907, 3435973837
  %v909 = vextract.low.u32 %v908
  %v910 = vextract.high.u32 %v908
  %v911 = vshrl.u32 %v910, 6
  %v912 = vmul.u32 %v911, 80
  %v913 = vsub.s32 %v907, %v912
  %v914 = vsub.s32 0, %v913
  %v915 = vsel %vm905, %v914, %v913
  %vm916 = vcmp.lt.s32.totalorder %v736, 0
  %v917 = vsub.s32 0, %v736
  %v918 = vsel %vm916, %v917, %v736
  %v919 = vmul.u32.u64.compose %v918, 3435973837
  %v920 = vextract.low.u32 %v919
  %v921 = vextract.high.u32 %v919
  %v922 = vshrl.u32 %v921, 6
  %v923 = vmul.u32 %v922, 80
  %v924 = vsub.s32 %v918, %v923
  %v925 = vsub.s32 0, %v924
  %v926 = vsel %vm916, %v925, %v924
  %vm927 = vcmp.lt.s32.totalorder %v737, 0
  %v928 = vsub.s32 0, %v737
  %v929 = vsel %vm927, %v928, %v737
  %v930 = vmul.u32.u64.compose %v929, 3435973837
  %v931 = vextract.low.u32 %v930
  %v932 = vextract.high.u32 %v930
  %v933 = vshrl.u32 %v932, 6
  %v934 = vmul.u32 %v933, 80
  %v935 = vsub.s32 %v929, %v934
  %v936 = vsub.s32 0, %v935
  %v937 = vsel %vm927, %v936, %v935
  %vm938 = vcmp.lt.s32.totalorder %v738, 0
  %v939 = vsub.s32 0, %v738
  %v940 = vsel %vm938, %v939, %v738
  %v941 = vmul.u32.u64.compose %v940, 3435973837
  %v942 = vextract.low.u32 %v941
  %v943 = vextract.high.u32 %v941
  %v944 = vshrl.u32 %v943, 6
  %v945 = vmul.u32 %v944, 80
  %v946 = vsub.s32 %v940, %v945
  %v947 = vsub.s32 0, %v946
  %v948 = vsel %vm938, %v947, %v946
  %vm949 = vcmp.lt.s32.totalorder %v739, 0
  %v950 = vsub.s32 0, %v739
  %v951 = vsel %vm949, %v950, %v739
  %v952 = vmul.u32.u64.compose %v951, 3435973837
  %v953 = vextract.low.u32 %v952
  %v954 = vextract.high.u32 %v952
  %v955 = vshrl.u32 %v954, 6
  %v956 = vmul.u32 %v955, 80
  %v957 = vsub.s32 %v951, %v956
  %v958 = vsub.s32 0, %v957
  %v959 = vsel %vm949, %v958, %v957
  %vm960 = vcmp.ne.s32.totalorder %v750, 0
  %vm961 = vcmp.ne.s32.totalorder %v761, 0
  %vm962 = vcmp.ne.s32.totalorder %v772, 0
  %vm963 = vcmp.ne.s32.totalorder %v783, 0
  %vm964 = vcmp.ne.s32.totalorder %v794, 0
  %vm965 = vcmp.ne.s32.totalorder %v805, 0
  %vm966 = vcmp.ne.s32.totalorder %v816, 0
  %vm967 = vcmp.ne.s32.totalorder %v827, 0
  %vm968 = vcmp.ne.s32.totalorder %v838, 0
  %vm969 = vcmp.ne.s32.totalorder %v849, 0
  %vm970 = vcmp.ne.s32.totalorder %v860, 0
  %vm971 = vcmp.ne.s32.totalorder %v871, 0
  %vm972 = vcmp.ne.s32.totalorder %v882, 0
  %vm973 = vcmp.ne.s32.totalorder %v893, 0
  %vm974 = vcmp.ne.s32.totalorder %v904, 0
  %vm975 = vcmp.ne.s32.totalorder %v915, 0
  %vm976 = vcmp.ne.s32.totalorder %v926, 0
  %vm977 = vcmp.ne.s32.totalorder %v937, 0
  %vm978 = vcmp.ne.s32.totalorder %v948, 0
  %vm979 = vcmp.ne.s32.totalorder %v959, 0
  %vm980 = vcmp.lt.s32.totalorder %v750, 0
  %vm981 = vcmp.lt.s32.totalorder %v761, 0
  %vm982 = vcmp.lt.s32.totalorder %v772, 0
  %vm983 = vcmp.lt.s32.totalorder %v783, 0
  %vm984 = vcmp.lt.s32.totalorder %v794, 0
  %vm985 = vcmp.lt.s32.totalorder %v805, 0
  %vm986 = vcmp.lt.s32.totalorder %v816, 0
  %vm987 = vcmp.lt.s32.totalorder %v827, 0
  %vm988 = vcmp.lt.s32.totalorder %v838, 0
  %vm989 = vcmp.lt.s32.totalorder %v849, 0
  %vm990 = vcmp.lt.s32.totalorder %v860, 0
  %vm991 = vcmp.lt.s32.totalorder %v871, 0
  %vm992 = vcmp.lt.s32.totalorder %v882, 0
  %vm993 = vcmp.lt.s32.totalorder %v893, 0
  %vm994 = vcmp.lt.s32.totalorder %v904, 0
  %vm995 = vcmp.lt.s32.totalorder %v915, 0
  %vm996 = vcmp.lt.s32.totalorder %v926, 0
  %vm997 = vcmp.lt.s32.totalorder %v937, 0
  %vm998 = vcmp.lt.s32.totalorder %v948, 0
  %vm999 = vcmp.lt.s32.totalorder %v959, 0
  %vm1000 = vmand %vm980, %vm960
  %vm1001 = vmand %vm981, %vm961
  %vm1002 = vmand %vm982, %vm962
  %vm1003 = vmand %vm983, %vm963
  %vm1004 = vmand %vm984, %vm964
  %vm1005 = vmand %vm985, %vm965
  %vm1006 = vmand %vm986, %vm966
  %vm1007 = vmand %vm987, %vm967
  %vm1008 = vmand %vm988, %vm968
  %vm1009 = vmand %vm989, %vm969
  %vm1010 = vmand %vm990, %vm970
  %vm1011 = vmand %vm991, %vm971
  %vm1012 = vmand %vm992, %vm972
  %vm1013 = vmand %vm993, %vm973
  %vm1014 = vmand %vm994, %vm974
  %vm1015 = vmand %vm995, %vm975
  %vm1016 = vmand %vm996, %vm976
  %vm1017 = vmand %vm997, %vm977
  %vm1018 = vmand %vm998, %vm978
  %vm1019 = vmand %vm999, %vm979
  %v1020 = vadd.s32 %v750, 80
  %v1021 = vadd.s32 %v761, 80
  %v1022 = vadd.s32 %v772, 80
  %v1023 = vadd.s32 %v783, 80
  %v1024 = vadd.s32 %v794, 80
  %v1025 = vadd.s32 %v805, 80
  %v1026 = vadd.s32 %v816, 80
  %v1027 = vadd.s32 %v827, 80
  %v1028 = vadd.s32 %v838, 80
  %v1029 = vadd.s32 %v849, 80
  %v1030 = vadd.s32 %v860, 80
  %v1031 = vadd.s32 %v871, 80
  %v1032 = vadd.s32 %v882, 80
  %v1033 = vadd.s32 %v893, 80
  %v1034 = vadd.s32 %v904, 80
  %v1035 = vadd.s32 %v915, 80
  %v1036 = vadd.s32 %v926, 80
  %v1037 = vadd.s32 %v937, 80
  %v1038 = vadd.s32 %v948, 80
  %v1039 = vadd.s32 %v959, 80
  %v1040 = vsel %vm1000, %v1020, %v750
  %v1041 = vsel %vm1001, %v1021, %v761
  %v1042 = vsel %vm1002, %v1022, %v772
  %v1043 = vsel %vm1003, %v1023, %v783
  %v1044 = vsel %vm1004, %v1024, %v794
  %v1045 = vsel %vm1005, %v1025, %v805
  %v1046 = vsel %vm1006, %v1026, %v816
  %v1047 = vsel %vm1007, %v1027, %v827
  %v1048 = vsel %vm1008, %v1028, %v838
  %v1049 = vsel %vm1009, %v1029, %v849
  %v1050 = vsel %vm1010, %v1030, %v860
  %v1051 = vsel %vm1011, %v1031, %v871
  %v1052 = vsel %vm1012, %v1032, %v882
  %v1053 = vsel %vm1013, %v1033, %v893
  %v1054 = vsel %vm1014, %v1034, %v904
  %v1055 = vsel %vm1015, %v1035, %v915
  %v1056 = vsel %vm1016, %v1036, %v926
  %v1057 = vsel %vm1017, %v1037, %v937
  %v1058 = vsel %vm1018, %v1038, %v948
  %v1059 = vsel %vm1019, %v1039, %v959
  %vm1060 = vcmp.lt.s32.totalorder %v1040, 16
  %vm1061 = vcmp.lt.s32.totalorder %v1041, 16
  %vm1062 = vcmp.lt.s32.totalorder %v1042, 16
  %vm1063 = vcmp.lt.s32.totalorder %v1043, 16
  %vm1064 = vcmp.lt.s32.totalorder %v1044, 16
  %vm1065 = vcmp.lt.s32.totalorder %v1045, 16
  %vm1066 = vcmp.lt.s32.totalorder %v1046, 16
  %vm1067 = vcmp.lt.s32.totalorder %v1047, 16
  %vm1068 = vcmp.lt.s32.totalorder %v1048, 16
  %vm1069 = vcmp.lt.s32.totalorder %v1049, 16
  %vm1070 = vcmp.lt.s32.totalorder %v1050, 16
  %vm1071 = vcmp.lt.s32.totalorder %v1051, 16
  %vm1072 = vcmp.lt.s32.totalorder %v1052, 16
  %vm1073 = vcmp.lt.s32.totalorder %v1053, 16
  %vm1074 = vcmp.lt.s32.totalorder %v1054, 16
  %vm1075 = vcmp.lt.s32.totalorder %v1055, 16
  %vm1076 = vcmp.lt.s32.totalorder %v1056, 16
  %vm1077 = vcmp.lt.s32.totalorder %v1057, 16
  %vm1078 = vcmp.lt.s32.totalorder %v1058, 16
  %vm1079 = vcmp.lt.s32.totalorder %v1059, 16
  %v1080 = vsel %vm1060, 1, 0
  %v1081 = vsel %vm1061, 1, 0
  %v1082 = vsel %vm1062, 1, 0
  %v1083 = vsel %vm1063, 1, 0
  %v1084 = vsel %vm1064, 1, 0
  %v1085 = vsel %vm1065, 1, 0
  %v1086 = vsel %vm1066, 1, 0
  %v1087 = vsel %vm1067, 1, 0
  %v1088 = vsel %vm1068, 1, 0
  %v1089 = vsel %vm1069, 1, 0
  %v1090 = vsel %vm1070, 1, 0
  %v1091 = vsel %vm1071, 1, 0
  %v1092 = vsel %vm1072, 1, 0
  %v1093 = vsel %vm1073, 1, 0
  %v1094 = vsel %vm1074, 1, 0
  %v1095 = vsel %vm1075, 1, 0
  %v1096 = vsel %vm1076, 1, 0
  %v1097 = vsel %vm1077, 1, 0
  %v1098 = vsel %vm1078, 1, 0
  %v1099 = vsel %vm1079, 1, 0
  %vm1100 = vcmp.eq.s32.totalorder %v1080, 1
  %vm1101 = vcmp.eq.s32.totalorder %v1081, 1
  %vm1102 = vcmp.eq.s32.totalorder %v1082, 1
  %vm1103 = vcmp.eq.s32.totalorder %v1083, 1
  %vm1104 = vcmp.eq.s32.totalorder %v1084, 1
  %vm1105 = vcmp.eq.s32.totalorder %v1085, 1
  %vm1106 = vcmp.eq.s32.totalorder %v1086, 1
  %vm1107 = vcmp.eq.s32.totalorder %v1087, 1
  %vm1108 = vcmp.eq.s32.totalorder %v1088, 1
  %vm1109 = vcmp.eq.s32.totalorder %v1089, 1
  %vm1110 = vcmp.eq.s32.totalorder %v1090, 1
  %vm1111 = vcmp.eq.s32.totalorder %v1091, 1
  %vm1112 = vcmp.eq.s32.totalorder %v1092, 1
  %vm1113 = vcmp.eq.s32.totalorder %v1093, 1
  %vm1114 = vcmp.eq.s32.totalorder %v1094, 1
  %vm1115 = vcmp.eq.s32.totalorder %v1095, 1
  %vm1116 = vcmp.eq.s32.totalorder %v1096, 1
  %vm1117 = vcmp.eq.s32.totalorder %v1097, 1
  %vm1118 = vcmp.eq.s32.totalorder %v1098, 1
  %vm1119 = vcmp.eq.s32.totalorder %v1099, 1
  %v1120 = vsel %vm1100, %v445, %v621
  %v1121 = vsel %vm1101, %v450, %v626
  %v1122 = vsel %vm1102, %v455, %v631
  %v1123 = vsel %vm1103, %v460, %v636
  %v1124 = vsel %vm1104, %v465, %v641
  %v1125 = vsel %vm1105, %v470, %v646
  %v1126 = vsel %vm1106, %v475, %v651
  %v1127 = vsel %vm1107, %v480, %v656
  %v1128 = vsel %vm1108, %v485, %v661
  %v1129 = vsel %vm1109, %v490, %v666
  %v1130 = vsel %vm1110, %v495, %v671
  %v1131 = vsel %vm1111, %v500, %v676
  %v1132 = vsel %vm1112, %v505, %v681
  %v1133 = vsel %vm1113, %v510, %v686
  %v1134 = vsel %vm1114, %v515, %v691
  %v1135 = vsel %vm1115, %v520, %v696
  %v1136 = vsel %vm1116, %v525, %v701
  %v1137 = vsel %vm1117, %v530, %v706
  %v1138 = vsel %vm1118, %v535, %v711
  %v1139 = vsel %vm1119, %v540, %v716
  %v1140 = vlaneseq
  %v1141 = vand.u32 %v1140, 127
  %vm1142 = vcmp.lt.s32.totalorder %v1141, 0
  %v1143 = vsub.s32 0, %v1141
  %v1144 = vsel %vm1142, %v1143, %v1141
  %v1145 = vmul.u32.u64.compose %v1144, 2748779070
  %v1146 = vextract.low.u32 %v1145
  %v1147 = vextract.high.u32 %v1145
  %v1148 = vshrl.u32 %v1147, 4
  %v1149 = vmul.u32 %v1148, 25
  %v1150 = vsub.s32 %v1144, %v1149
  %v1151 = vsub.s32 0, %v1150
  %v1152 = vsel %vm1142, %v1151, %v1150
  %vm1153 = vcmp.ne.s32.totalorder %v1152, 0
  %vm1154 = vcmp.lt.s32.totalorder %v1152, 0
  %vm1155 = vmand %vm1154, %vm1153
  %v1156 = vadd.s32 %v1152, 25
  %v1157 = vsel %vm1155, %v1156, %v1152
  %vm1158 = vcmp.eq.s32.totalorder %v1157, 2
  %vm1159 = vcmp.eq.s32.totalorder %v1157, 3
  %vm1160 = vmor %vm1158, %vm1159
  %v1161 = vsub.f32 0.0, %v1120
  %v1162 = vsub.f32 0.0, %v1121
  %v1163 = vsub.f32 0.0, %v1122
  %v1164 = vsub.f32 0.0, %v1123
  %v1165 = vsub.f32 0.0, %v1124
  %v1166 = vsub.f32 0.0, %v1125
  %v1167 = vsub.f32 0.0, %v1126
  %v1168 = vsub.f32 0.0, %v1127
  %v1169 = vsub.f32 0.0, %v1128
  %v1170 = vsub.f32 0.0, %v1129
  %v1171 = vsub.f32 0.0, %v1130
  %v1172 = vsub.f32 0.0, %v1131
  %v1173 = vsub.f32 0.0, %v1132
  %v1174 = vsub.f32 0.0, %v1133
  %v1175 = vsub.f32 0.0, %v1134
  %v1176 = vsub.f32 0.0, %v1135
  %v1177 = vsub.f32 0.0, %v1136
  %v1178 = vsub.f32 0.0, %v1137
  %v1179 = vsub.f32 0.0, %v1138
  %v1180 = vsub.f32 0.0, %v1139
  %v1181 = vsel %vm1160, 1, 0
  %vm1182 = vcmp.eq.s32.totalorder %v1181, 1
  %v1183 = vsel %vm1182, %v1120, %v1161
  %v1184 = vsel %vm1182, %v1121, %v1162
  %v1185 = vsel %vm1182, %v1122, %v1163
  %v1186 = vsel %vm1182, %v1123, %v1164
  %v1187 = vsel %vm1182, %v1124, %v1165
  %v1188 = vsel %vm1182, %v1125, %v1166
  %v1189 = vsel %vm1182, %v1126, %v1167
  %v1190 = vsel %vm1182, %v1127, %v1168
  %v1191 = vsel %vm1182, %v1128, %v1169
  %v1192 = vsel %vm1182, %v1129, %v1170
  %v1193 = vsel %vm1182, %v1130, %v1171
  %v1194 = vsel %vm1182, %v1131, %v1172
  %v1195 = vsel %vm1182, %v1132, %v1173
  %v1196 = vsel %vm1182, %v1133, %v1174
  %v1197 = vsel %vm1182, %v1134, %v1175
  %v1198 = vsel %vm1182, %v1135, %v1176
  %v1199 = vsel %vm1182, %v1136, %v1177
  %v1200 = vsel %vm1182, %v1137, %v1178
  %v1201 = vsel %vm1182, %v1138, %v1179
  %v1202 = vsel %vm1182, %v1139, %v1180
  %v1203 = vmin.f32 %v1183, 40.0
  %v1204 = vmin.f32 %v1184, 40.0
  %v1205 = vmin.f32 %v1185, 40.0
  %v1206 = vmin.f32 %v1186, 40.0
  %v1207 = vmin.f32 %v1187, 40.0
  %v1208 = vmin.f32 %v1188, 40.0
  %v1209 = vmin.f32 %v1189, 40.0
  %v1210 = vmin.f32 %v1190, 40.0
  %v1211 = vmin.f32 %v1191, 40.0
  %v1212 = vmin.f32 %v1192, 40.0
  %v1213 = vmin.f32 %v1193, 40.0
  %v1214 = vmin.f32 %v1194, 40.0
  %v1215 = vmin.f32 %v1195, 40.0
  %v1216 = vmin.f32 %v1196, 40.0
  %v1217 = vmin.f32 %v1197, 40.0
  %v1218 = vmin.f32 %v1198, 40.0
  %v1219 = vmin.f32 %v1199, 40.0
  %v1220 = vmin.f32 %v1200, 40.0
  %v1221 = vmin.f32 %v1201, 40.0
  %v1222 = vmin.f32 %v1202, 40.0
  %v1223 = vmul.f32 %v1203, 1.442695
  %v1224 = vpow.pop %v1223
  %v1225 = vmul.f32 %v1204, 1.442695
  %v1226 = vpow.pop %v1225
  %v1227 = vmul.f32 %v1205, 1.442695
  %v1228 = vpow.pop %v1227
  %v1229 = vmul.f32 %v1206, 1.442695
  %v1230 = vpow.pop %v1229
  %v1231 = vmul.f32 %v1207, 1.442695
  %v1232 = vpow.pop %v1231
  %v1233 = vmul.f32 %v1208, 1.442695
  %v1234 = vpow.pop %v1233
  %v1235 = vmul.f32 %v1209, 1.442695
  %v1236 = vpow.pop %v1235
  %v1237 = vmul.f32 %v1210, 1.442695
  %v1238 = vpow.pop %v1237
  %v1239 = vmul.f32 %v1211, 1.442695
  %v1240 = vpow.pop %v1239
  %v1241 = vmul.f32 %v1212, 1.442695
  %v1242 = vpow.pop %v1241
  %v1243 = vmul.f32 %v1213, 1.442695
  %v1244 = vpow.pop %v1243
  %v1245 = vmul.f32 %v1214, 1.442695
  %v1246 = vpow.pop %v1245
  %v1247 = vmul.f32 %v1215, 1.442695
  %v1248 = vpow.pop %v1247
  %v1249 = vmul.f32 %v1216, 1.442695
  %v1250 = vpow.pop %v1249
  %v1251 = vmul.f32 %v1217, 1.442695
  %v1252 = vpow.pop %v1251
  %v1253 = vmul.f32 %v1218, 1.442695
  %v1254 = vpow.pop %v1253
  %v1255 = vmul.f32 %v1219, 1.442695
  %v1256 = vpow.pop %v1255
  %v1257 = vmul.f32 %v1220, 1.442695
  %v1258 = vpow.pop %v1257
  %v1259 = vmul.f32 %v1221, 1.442695
  %v1260 = vpow.pop %v1259
  %v1261 = vmul.f32 %v1222, 1.442695
  %v1262 = vpow.pop %v1261
  %v1263 = vadd.f32 %v1224, 1.0
  %v1264 = vadd.f32 %v1226, 1.0
  %v1265 = vadd.f32 %v1228, 1.0
  %v1266 = vadd.f32 %v1230, 1.0
  %v1267 = vadd.f32 %v1232, 1.0
  %v1268 = vadd.f32 %v1234, 1.0
  %v1269 = vadd.f32 %v1236, 1.0
  %v1270 = vadd.f32 %v1238, 1.0
  %v1271 = vadd.f32 %v1240, 1.0
  %v1272 = vadd.f32 %v1242, 1.0
  %v1273 = vadd.f32 %v1244, 1.0
  %v1274 = vadd.f32 %v1246, 1.0
  %v1275 = vadd.f32 %v1248, 1.0
  %v1276 = vadd.f32 %v1250, 1.0
  %v1277 = vadd.f32 %v1252, 1.0
  %v1278 = vadd.f32 %v1254, 1.0
  %v1279 = vadd.f32 %v1256, 1.0
  %v1280 = vadd.f32 %v1258, 1.0
  %v1281 = vadd.f32 %v1260, 1.0
  %v1282 = vadd.f32 %v1262, 1.0
  %v1283 = vrcp.pop %v1263
  %v1284 = vrcp.pop %v1264
  %v1285 = vrcp.pop %v1265
  %v1286 = vrcp.pop %v1266
  %v1287 = vrcp.pop %v1267
  %v1288 = vrcp.pop %v1268
  %v1289 = vrcp.pop %v1269
  %v1290 = vrcp.pop %v1270
  %v1291 = vrcp.pop %v1271
  %v1292 = vrcp.pop %v1272
  %v1293 = vrcp.pop %v1273
  %v1294 = vrcp.pop %v1274
  %v1295 = vrcp.pop %v1275
  %v1296 = vrcp.pop %v1276
  %v1297 = vrcp.pop %v1277
  %v1298 = vrcp.pop %v1278
  %v1299 = vrcp.pop %v1279
  %v1300 = vrcp.pop %v1280
  %v1301 = vrcp.pop %v1281
  %v1302 = vrcp.pop %v1282
  %v1303 = vld [vmem:[%s7] sm:$0xff]
  %v1304 = vld [vmem:[%s7 + $0x8] sm:$0xff]
  %v1305 = vld [vmem:[%s7 + $0x10] sm:$0xff]
  %v1306 = vld [vmem:[%s7 + $0x18] sm:$0xff]
  %v1307 = vld [vmem:[%s7 + $0x20] sm:$0xff]
  %v1308 = vld [vmem:[%s7 + $0x28] sm:$0xff]
  %v1309 = vld [vmem:[%s7 + $0x30] sm:$0xff]
  %v1310 = vld [vmem:[%s7 + $0x38] sm:$0xff]
  %v1311 = vld [vmem:[%s7 + $0x40] sm:$0xff]
  %v1312 = vld [vmem:[%s7 + $0x48] sm:$0xff]
  %v1313 = vld [vmem:[%s7 + $0x50] sm:$0xff]
  %v1314 = vld [vmem:[%s7 + $0x58] sm:$0xff]
  %v1315 = vld [vmem:[%s7 + $0x60] sm:$0xff]
  %v1316 = vld [vmem:[%s7 + $0x68] sm:$0xff]
  %v1317 = vld [vmem:[%s7 + $0x70] sm:$0xff]
  %v1318 = vld [vmem:[%s7 + $0x78] sm:$0xff]
  %v1319 = vld [vmem:[%s7 + $0x80] sm:$0xff]
  %v1320 = vld [vmem:[%s7 + $0x88] sm:$0xff]
  %v1321 = vld [vmem:[%s7 + $0x90] sm:$0xff]
  %v1322 = vld [vmem:[%s7 + $0x98] sm:$0xff]
  %v1323 = vadd.f32 %v1283, %v1303
  %v1324 = vadd.f32 %v1284, %v1304
  %v1325 = vadd.f32 %v1285, %v1305
  %v1326 = vadd.f32 %v1286, %v1306
  %v1327 = vadd.f32 %v1287, %v1307
  %v1328 = vadd.f32 %v1288, %v1308
  %v1329 = vadd.f32 %v1289, %v1309
  %v1330 = vadd.f32 %v1290, %v1310
  %v1331 = vadd.f32 %v1291, %v1311
  %v1332 = vadd.f32 %v1292, %v1312
  %v1333 = vadd.f32 %v1293, %v1313
  %v1334 = vadd.f32 %v1294, %v1314
  %v1335 = vadd.f32 %v1295, %v1315
  %v1336 = vadd.f32 %v1296, %v1316
  %v1337 = vadd.f32 %v1297, %v1317
  %v1338 = vadd.f32 %v1298, %v1318
  %v1339 = vadd.f32 %v1299, %v1319
  %v1340 = vadd.f32 %v1300, %v1320
  %v1341 = vadd.f32 %v1301, %v1321
  %v1342 = vadd.f32 %v1302, %v1322
  %v1343 = vsel %vm1182, %v1224, %v1323
  %v1344 = vsel %vm1182, %v1226, %v1324
  %v1345 = vsel %vm1182, %v1228, %v1325
  %v1346 = vsel %vm1182, %v1230, %v1326
  %v1347 = vsel %vm1182, %v1232, %v1327
  %v1348 = vsel %vm1182, %v1234, %v1328
  %v1349 = vsel %vm1182, %v1236, %v1329
  %v1350 = vsel %vm1182, %v1238, %v1330
  %v1351 = vsel %vm1182, %v1240, %v1331
  %v1352 = vsel %vm1182, %v1242, %v1332
  %v1353 = vsel %vm1182, %v1244, %v1333
  %v1354 = vsel %vm1182, %v1246, %v1334
  %v1355 = vsel %vm1182, %v1248, %v1335
  %v1356 = vsel %vm1182, %v1250, %v1336
  %v1357 = vsel %vm1182, %v1252, %v1337
  %v1358 = vsel %vm1182, %v1254, %v1338
  %v1359 = vsel %vm1182, %v1256, %v1339
  %v1360 = vsel %vm1182, %v1258, %v1340
  %v1361 = vsel %vm1182, %v1260, %v1341
  %v1362 = vsel %vm1182, %v1262, %v1342
  %v1363 = vld [vmem:[%s8] sm:$0xff]
  %v1364 = vld [vmem:[%s8 + $0x8] sm:$0xff]
  %v1365 = vld [vmem:[%s8 + $0x10] sm:$0xff]
  %v1366 = vld [vmem:[%s8 + $0x18] sm:$0xff]
  %v1367 = vld [vmem:[%s8 + $0x20] sm:$0xff]
  %v1368 = vld [vmem:[%s8 + $0x28] sm:$0xff]
  %v1369 = vld [vmem:[%s8 + $0x30] sm:$0xff]
  %v1370 = vld [vmem:[%s8 + $0x38] sm:$0xff]
  %v1371 = vld [vmem:[%s8 + $0x40] sm:$0xff]
  %v1372 = vld [vmem:[%s8 + $0x48] sm:$0xff]
  %v1373 = vld [vmem:[%s8 + $0x50] sm:$0xff]
  %v1374 = vld [vmem:[%s8 + $0x58] sm:$0xff]
  %v1375 = vld [vmem:[%s8 + $0x60] sm:$0xff]
  %v1376 = vld [vmem:[%s8 + $0x68] sm:$0xff]
  %v1377 = vld [vmem:[%s8 + $0x70] sm:$0xff]
  %v1378 = vld [vmem:[%s8 + $0x78] sm:$0xff]
  %v1379 = vld [vmem:[%s8 + $0x80] sm:$0xff]
  %v1380 = vld [vmem:[%s8 + $0x88] sm:$0xff]
  %v1381 = vld [vmem:[%s8 + $0x90] sm:$0xff]
  %v1382 = vld [vmem:[%s8 + $0x98] sm:$0xff]
  %v1383 = vmul.f32 %v1343, %v1363
  %v1384 = vmul.f32 %v1344, %v1364
  %v1385 = vmul.f32 %v1345, %v1365
  %v1386 = vmul.f32 %v1346, %v1366
  %v1387 = vmul.f32 %v1347, %v1367
  %v1388 = vmul.f32 %v1348, %v1368
  %v1389 = vmul.f32 %v1349, %v1369
  %v1390 = vmul.f32 %v1350, %v1370
  %v1391 = vmul.f32 %v1351, %v1371
  %v1392 = vmul.f32 %v1352, %v1372
  %v1393 = vmul.f32 %v1353, %v1373
  %v1394 = vmul.f32 %v1354, %v1374
  %v1395 = vmul.f32 %v1355, %v1375
  %v1396 = vmul.f32 %v1356, %v1376
  %v1397 = vmul.f32 %v1357, %v1377
  %v1398 = vmul.f32 %v1358, %v1378
  %v1399 = vmul.f32 %v1359, %v1379
  %v1400 = vmul.f32 %v1360, %v1380
  %v1401 = vmul.f32 %v1361, %v1381
  %v1402 = vmul.f32 %v1362, %v1382
  %1403 = vst [vmem:[%s9] sm:$0xff] %v1383
  %1404 = vst [vmem:[%s9 + $0x8] sm:$0xff] %v1384
  %1405 = vst [vmem:[%s9 + $0x10] sm:$0xff] %v1385
  %1406 = vst [vmem:[%s9 + $0x18] sm:$0xff] %v1386
  %1407 = vst [vmem:[%s9 + $0x20] sm:$0xff] %v1387
  %1408 = vst [vmem:[%s9 + $0x28] sm:$0xff] %v1388
  %1409 = vst [vmem:[%s9 + $0x30] sm:$0xff] %v1389
  %1410 = vst [vmem:[%s9 + $0x38] sm:$0xff] %v1390
  %1411 = vst [vmem:[%s9 + $0x40] sm:$0xff] %v1391
  %1412 = vst [vmem:[%s9 + $0x48] sm:$0xff] %v1392
  %1413 = vst [vmem:[%s9 + $0x50] sm:$0xff] %v1393
  %1414 = vst [vmem:[%s9 + $0x58] sm:$0xff] %v1394
  %1415 = vst [vmem:[%s9 + $0x60] sm:$0xff] %v1395
  %1416 = vst [vmem:[%s9 + $0x68] sm:$0xff] %v1396
  %1417 = vst [vmem:[%s9 + $0x70] sm:$0xff] %v1397
  %1418 = vst [vmem:[%s9 + $0x78] sm:$0xff] %v1398
  %1419 = vst [vmem:[%s9 + $0x80] sm:$0xff] %v1399
  %1420 = vst [vmem:[%s9 + $0x88] sm:$0xff] %v1400
  %1421 = vst [vmem:[%s9 + $0x90] sm:$0xff] %v1401
  %1422 = vst [vmem:[%s9 + $0x98] sm:$0xff] %v1402
  // Predicated region
  $region38: #{yolo_forward_device.1} parent=0 // pred_check
    _
  $region39: #{yolo_forward_device.1} parent=0 // pred_check_branch
    %1424 = sbr.rel (0) target = $region41
  $region40: #{yolo_forward_device.1} parent=0 // pred_region
    _
  $region41: #{yolo_forward_device.1} parent=0 // pred_fallthru
    _
  // Predicated region
  $region42: #{yolo_forward_device.1} parent=0 // pred_check
    _
  $region43: #{yolo_forward_device.1} parent=0 // pred_check_branch
    %1426 = sbr.rel (0) target = $region45
  $region44: #{yolo_forward_device.1} parent=0 // pred_region
    _
  $region45: #{yolo_forward_device.1} parent=0 // pred_fallthru
    _

</llo_original>
